<compile_context>
chip_gen: v7x
topology: tpu7x:2x2x1
jax: 0.10.0
libtpu: 0.0.40
codegen_flags: <defaults>
</compile_context>

<pallas_src>
import functools

import jax
import jax.numpy as jnp
from jax.experimental import pallas as pl
from jax.experimental.pallas import tpu as pltpu

NEG_SLOPE = 0.01  # torch.nn.LeakyReLU default negative_slope


def _leaky_relu(x):
    return jnp.where(x > 0, x, NEG_SLOPE * x)


def _dot(a, b):
    return jnp.dot(a, b, preferred_element_type=jnp.float32)


def _bf(x):
    return x.astype(jnp.bfloat16)


# ---------------------------------------------------------------------------
# Fused AttrGeneration + EdgeGeneration kernel (one grid step = one instance).
#
#   attr_in  = [sub_emb | tar_emb | tarfeat_emb | wlabel | wsec]   (1, 2F+3L)
#   add_feat = MLP_a(attr_in)                                       (1, F)
#   inj      = (feat_max - feat_min) * sigmoid(add_feat) + feat_min
#
#   e1 = sub_feat @ W_sub + inj @ W_add + norm_a * e_w1_norm_row + e_b1_eff
#        (tar_xw / wlabel / wsec contributions folded into e_b1_eff in glue)
#   score = MLP_e tail (512 -> 32 -> 1) of leaky(e1)                (S, 1)
# ---------------------------------------------------------------------------
def ratgnn_fused_kernel(
    attr_in_ref,            # (1, 2F+3L)  bf16   per-instance
    sub_feat_ref,           # (S, F)      bf16   per-instance
    norm_a_ref,             # (S, 1)      f32    per-instance
    e_b1_ref,               # (1, 512)    f32    per-instance effective bias
    a_w1_ref,               # (2F+3L,128) bf16   resident
    a_w2_ref,               # (128, 512)  bf16   resident
    a_w3_ref,               # (512, F)    bf16   resident
    w_sub_ref,              # (F, 512)    bf16   resident  (gw12 @ e_w1[L:2L])
    w_add_ref,              # (F, 512)    bf16   resident  (gw12 @ e_w1[2L:3L])
    e_w1n_ref,              # (1, 512)    f32    resident  (norm_a row of e_w1)
    e_w2_ref,               # (512, 32)   bf16   resident
    e_w3_ref,               # (32, 1)     bf16   resident
    bias_ref,               # (5, 512)    f32    rows: a_b1,a_b2,a_b3,e_b2,e_b3
    inj_ref,                # out: (1, F) f32
    score_ref,              # out: (S, 1) f32
    *, feat_dim, feat_max, feat_min):
    F = feat_dim

    a_b1 = bias_ref[0:1, 0:128]
    a_b2 = bias_ref[1:2, 0:512]
    a_b3 = bias_ref[2:3, 0:F]
    e_b2 = bias_ref[3:4, 0:32]
    e_b3 = bias_ref[4:5, 0:1]

    # ----- AttrGeneration MLP (in_a -> 128 -> 512 -> F) -----
    h1 = _leaky_relu(_dot(attr_in_ref[...], a_w1_ref[...]) + a_b1)     # (1, 128)
    h2 = _leaky_relu(_dot(_bf(h1), a_w2_ref[...]) + a_b2)              # (1, 512)
    add_feat = _dot(_bf(h2), a_w3_ref[...]) + a_b3                     # (1, F)

    # sigmoid via exp + approximate reciprocal (both on the EUP slot)
    sig = pl.reciprocal(1.0 + jnp.exp(-add_feat), approx=True)
    inj = (feat_max - feat_min) * sig + feat_min                       # (1, F)
    inj_ref[...] = inj

    # ----- EdgeGeneration (inj never leaves the chip) -----
    e1 = (_dot(sub_feat_ref[...], w_sub_ref[...])                      # (S, 512)
          + _dot(_bf(inj), w_add_ref[...])                             # (1, 512)
          + norm_a_ref[...] * e_w1n_ref[...]                           # (S,1)*(1,512)
          + e_b1_ref[...])
    e1 = _leaky_relu(e1)
    e2 = _leaky_relu(_dot(_bf(e1), e_w2_ref[...]) + e_b2)              # (S, 32)
    # TODO(synk): for S in the hundreds, switch to a lane-dense (1, S) score
    # layout; at S=16 the (S, 1) masked store is negligible.
    score_ref[...] = _dot(_bf(e2), e_w3_ref[...]) + e_b3               # (S, 1)


def _per_instance_spec(tail):
    n = len(tail)
    return pl.BlockSpec((None,) + tuple(tail),
                        lambda b, _n=n: (b,) + (0,) * _n)


def _resident_spec(shape):
    n = len(shape)
    return pl.BlockSpec(tuple(shape), lambda b, _n=n: (0,) * _n)


# ---------------------------------------------------------------------------
# Parameter init (deterministic, kaiming-normal-like; Linear stored as (in,out))
# ---------------------------------------------------------------------------
def init_ratgnn_params(key, feat_dim, label_dim, gcn_hid):
    in_a = 3 * label_dim + 2 * feat_dim          # AttrGeneration MLP input
    in_e = 3 * label_dim + 2 * feat_dim + 1      # EdgeGeneration MLP input (tar_num=1)
    assert in_e == 5 * label_dim + 1, "original code requires feat_dim == label_dim"
    ks = jax.random.split(key, 16)

    def kaiming(k, fan_in, fan_out):
        return (jax.random.normal(k, (fan_in, fan_out), jnp.float32)
                * jnp.sqrt(2.0 / fan_in))

    def bias(k, n):
        return 0.01 * jax.random.normal(k, (1, n), jnp.float32)

    return dict(
        weight1=kaiming(ks[0], feat_dim, gcn_hid),
        weight2=kaiming(ks[1], gcn_hid, label_dim),
        # AttrGeneration.obtain_feat : in_a -> 128 -> 512 -> feat_dim
        a_w1=kaiming(ks[2], in_a, 128), a_b1=bias(ks[3], 128),
        a_w2=kaiming(ks[4], 128, 512), a_b2=bias(ks[5], 512),
        a_w3=kaiming(ks[6], 512, feat_dim), a_b3=bias(ks[7], feat_dim),
        # EdgeGeneration.obtain_score : in_e -> 512 -> 32 -> 1
        e_w1=kaiming(ks[8], in_e, 512), e_b1=bias(ks[9], 512),
        e_w2=kaiming(ks[10], 512, 32), e_b2=bias(ks[11], 32),
        e_w3=kaiming(ks[12], 32, 1), e_b3=bias(ks[13], 1),
    )


# ---------------------------------------------------------------------------
# Batched scores: B independent (target, sub-graph) instances, one pallas_call.
# ---------------------------------------------------------------------------
def ratgnn_scores_batched(params, targets, sub_graph_nodes, feat, nor_adj_tensor,
                          node_emb, wlabel, wsec, *, feat_max, feat_min, label_dim):
    B = targets.shape[0]
    S = sub_graph_nodes.shape[1]
    F = feat.shape[1]
    L = label_dim
    in_a = 2 * F + 3 * L

    wlabel2 = wlabel.reshape(1, L).astype(jnp.float32)   # unsqueeze(0)
    wsec2 = wsec.reshape(1, L).astype(jnp.float32)

    # ----- glue: gathers + every glue-computable matmul / fold -----
    sub_emb = jnp.mean(node_emb[sub_graph_nodes], axis=1)               # (B, F)
    tar_emb = node_emb[targets]                                         # (B, F)
    tar_feat = feat[targets]                                            # (B, F)
    sub_feat = feat[sub_graph_nodes]                                    # (B, S, F)
    norm_a = nor_adj_tensor[sub_graph_nodes, targets[:, None]][..., None]  # (B, S, 1)

    w1 = params["weight1"]
    w2 = params["weight2"]
    # target GCN embedding (attr path: ReLU between the two layers), hoisted
    tfe = jnp.maximum(tar_feat @ w1, 0.0) @ w2                          # (B, L)

    attr_in = jnp.concatenate(
        [sub_emb, tar_emb, tfe,
         jnp.broadcast_to(wlabel2, (B, L)), jnp.broadcast_to(wsec2, (B, L))],
        axis=1).reshape(B, 1, in_a)

    # edge path: NO nonlinearity between the two GCN layers -> fold freely
    gw12 = w1 @ w2                                                      # (F, L)
    e_w1 = params["e_w1"]                                               # (5L+1, 512)
    w_sub = gw12 @ e_w1[L:2 * L]                                        # (F, 512)
    w_add = gw12 @ e_w1[2 * L:3 * L]                                    # (F, 512)
    e_w1_norm = e_w1[3 * L:3 * L + 1]                                   # (1, 512)
    tar_xw = tar_feat @ gw12                                            # (B, L)
    e_b1_eff = (params["e_b1"]
                + tar_xw @ e_w1[0:L]
                + wlabel2 @ e_w1[3 * L + 1:4 * L + 1]
                + wsec2 @ e_w1[4 * L + 1:5 * L + 1]).reshape(B, 1, 512)

    # bias pack (rows: a_b1, a_b2, a_b3, e_b2, e_b3), lane-padded to 512
    pack_w = 512

    def pad_row(v):
        v = v.reshape(1, -1)
        return jnp.pad(v, ((0, 0), (0, pack_w - v.shape[1])))

    bias_pack = jnp.concatenate(
        [pad_row(params["a_b1"]), pad_row(params["a_b2"]), pad_row(params["a_b3"]),
         pad_row(params["e_b2"]), pad_row(params["e_b3"])], axis=0)     # (5, 512)

    kernel_args = (
        _bf(attr_in), _bf(sub_feat),
        norm_a.astype(jnp.float32), e_b1_eff.astype(jnp.float32),
        _bf(params["a_w1"]), _bf(params["a_w2"]), _bf(params["a_w3"]),
        _bf(w_sub), _bf(w_add), e_w1_norm.astype(jnp.float32),
        _bf(params["e_w2"]), _bf(params["e_w3"]), bias_pack,
    )

    in_specs = [
        _per_instance_spec((1, in_a)),
        _per_instance_spec((S, F)),
        _per_instance_spec((S, 1)),
        _per_instance_spec((1, 512)),
    ] + [_resident_spec(a.shape) for a in kernel_args[4:]]

    inj, score = pl.pallas_call(
        functools.partial(ratgnn_fused_kernel, feat_dim=F,
                          feat_max=float(feat_max), feat_min=float(feat_min)),
        grid=(B,),
        out_shape=(jax.ShapeDtypeStruct((B, 1, F), jnp.float32),
                   jax.ShapeDtypeStruct((B, S, 1), jnp.float32)),
        in_specs=in_specs,
        out_specs=(_per_instance_spec((1, F)), _per_instance_spec((S, 1))),
        compiler_params=pltpu.CompilerParams(dimension_semantics=("parallel",)),
    )(*kernel_args)

    return inj.reshape(B, F), score.reshape(B, S)


# ---------------------------------------------------------------------------
# RATGNN.forward (tar_num=1, dense normalized adjacency, single instance)
# ---------------------------------------------------------------------------
def ratgnn_forward(params, target, sub_graph_nodes, budget, feat,
                   nor_adj_tensor, node_emb, wlabel, wsec, *,
                   feat_max, feat_min, label_dim, discrete=False,
                   feat_num=None, train_flag=False):
    # TODO(synk): feat_max/feat_min are treated as scalars; if the original
    # model uses per-feature max/min vectors, pass them through unchanged in
    # glue (the sigmoid rescale would then be per-lane).
    targets = jnp.asarray(target, jnp.int32).reshape(1)
    subs = jnp.asarray(sub_graph_nodes, jnp.int32).reshape(1, -1)

    inj, logits_b = ratgnn_scores_batched(
        params, targets, subs, feat, nor_adj_tensor, node_emb, wlabel, wsec,
        feat_max=feat_max, feat_min=feat_min, label_dim=label_dim)

    add_feat = inj[0]                                      # (F,)  == inj_feat
    logits = logits_b[0]                                   # (S,)

    # top-k / straight-through hard score (glue; data-dependent scatter)
    if train_flag:
        soft = jax.nn.softmax(logits, axis=-1)
        _, idx = jax.lax.top_k(soft, budget)
        hard = jnp.zeros_like(logits).at[idx].set(1.0)
        score = hard - jax.lax.stop_gradient(soft) + soft  # st_topk
        disc_score = score
    else:
        _, idx = jax.lax.top_k(logits, budget)
        score = jnp.zeros_like(logits).at[idx].set(1.0)
        # RATGNN eval branch: topk again on the hard score (tie-break note:
        # jax.lax.top_k ordering may differ from torch.topk on exact ties).
        _, edge_idx = jax.lax.top_k(score, budget)
        disc_score = jnp.zeros_like(score).at[edge_idx].set(1.0)
        # TODO(synk): discrete-feature branch only rewrites self.new_feat[-1]
        # (not part of the returned values), so it is omitted here.

    masked_score_idx = subs
    return add_feat, disc_score, masked_score_idx


# ---------------------------------------------------------------------------
if __name__ == "__main__":
    key = jax.random.PRNGKey(0)
    N, FEAT_DIM, LABEL_DIM, GCN_HID = 32, 16, 16, 32   # feat_dim == label_dim (required by original code)
    S, BUDGET = 16, 4
    FEAT_MAX, FEAT_MIN = 1.0, -0.5

    k1, k2, k3, k4, k5, k6, k7 = jax.random.split(key, 7)
    feat = jax.random.normal(k1, (N, FEAT_DIM), jnp.float32)
    node_emb = jax.random.normal(k2, (N, FEAT_DIM), jnp.float32)
    adj = jax.random.uniform(k3, (N, N), jnp.float32)
    nor_adj_tensor = adj / jnp.sum(adj, axis=1, keepdims=True)
    wlabel = jax.random.normal(k4, (LABEL_DIM,), jnp.float32)
    wsec = jax.random.normal(k5, (LABEL_DIM,), jnp.float32)
    sub_graph_nodes = jax.random.permutation(k6, N)[:S]
    target = 3

    params = init_ratgnn_params(jax.random.PRNGKey(42),
                                FEAT_DIM, LABEL_DIM, GCN_HID)

    # --- single-instance forward (matches original module semantics) ---
    add_feat, disc_score, masked_score_idx = ratgnn_forward(
        params, target, sub_graph_nodes, BUDGET, feat, nor_adj_tensor,
        node_emb, wlabel, wsec,
        feat_max=FEAT_MAX, feat_min=FEAT_MIN, label_dim=LABEL_DIM,
        discrete=False, feat_num=3, train_flag=False)
    jax.block_until_ready((add_feat, disc_score, masked_score_idx))
    assert add_feat.shape == (FEAT_DIM,)
    assert disc_score.shape == (S,)
    assert masked_score_idx.shape == (1, S)

    # --- batched path (B=2): exercises the parallel batch grid axis ---
    targets_b = jnp.array([3, 7], jnp.int32)
    subs_b = jnp.stack([sub_graph_nodes,
                        jax.random.permutation(k7, N)[:S]]).astype(jnp.int32)
    inj_b, logits_b = ratgnn_scores_batched(
        params, targets_b, subs_b, feat, nor_adj_tensor, node_emb, wlabel, wsec,
        feat_max=FEAT_MAX, feat_min=FEAT_MIN, label_dim=LABEL_DIM)
    jax.block_until_ready((inj_b, logits_b))
    assert inj_b.shape == (2, FEAT_DIM)
    assert logits_b.shape == (2, S)

    print("KERNEL_OK")
</pallas_src>

<mosaic_0001>
module attributes {stable_mosaic.version = 11 : i64} {
  func.func @ratgnn_fused_kernel(%arg0: i32, %arg1: memref<1x1x80xbf16, #tpu.memory_space<vmem>>, %arg2: memref<1x16x16xbf16, #tpu.memory_space<vmem>>, %arg3: memref<1x16x1xf32, #tpu.memory_space<vmem>>, %arg4: memref<1x1x512xf32, #tpu.memory_space<vmem>>, %arg5: memref<80x128xbf16, #tpu.memory_space<vmem>>, %arg6: memref<128x512xbf16, #tpu.memory_space<vmem>>, %arg7: memref<512x16xbf16, #tpu.memory_space<vmem>>, %arg8: memref<16x512xbf16, #tpu.memory_space<vmem>>, %arg9: memref<16x512xbf16, #tpu.memory_space<vmem>>, %arg10: memref<1x512xf32, #tpu.memory_space<vmem>>, %arg11: memref<512x32xbf16, #tpu.memory_space<vmem>>, %arg12: memref<32x1xbf16, #tpu.memory_space<vmem>>, %arg13: memref<5x512xf32, #tpu.memory_space<vmem>>, %arg14: memref<1x1x16xf32, #tpu.memory_space<vmem>>, %arg15: memref<1x16x1xf32, #tpu.memory_space<vmem>>) attributes {dimension_semantics = [#tpu.dimension_semantics<parallel>], iteration_bounds = array<i64: 1>, scalar_prefetch = 0 : i64, scratch_operands = 0 : i64, tpu.core_type = #tpu.core_type<tc>, window_params = [{transform_indices = @transform_0, window_bounds = array<i64: 1, 1, 80>}, {transform_indices = @transform_1, window_bounds = array<i64: 1, 16, 16>}, {transform_indices = @transform_2, window_bounds = array<i64: 1, 16, 1>}, {transform_indices = @transform_3, window_bounds = array<i64: 1, 1, 512>}, {pipeline_mode = #tpu.pipeline_mode<synchronous>, transform_indices = @transform_4, window_bounds = array<i64: 80, 128>}, {pipeline_mode = #tpu.pipeline_mode<synchronous>, transform_indices = @transform_5, window_bounds = array<i64: 128, 512>}, {pipeline_mode = #tpu.pipeline_mode<synchronous>, transform_indices = @transform_6, window_bounds = array<i64: 512, 16>}, {pipeline_mode = #tpu.pipeline_mode<synchronous>, transform_indices = @transform_7, window_bounds = array<i64: 16, 512>}, {pipeline_mode = #tpu.pipeline_mode<synchronous>, transform_indices = @transform_8, window_bounds = array<i64: 16, 512>}, {pipeline_mode = #tpu.pipeline_mode<synchronous>, transform_indices = @transform_9, window_bounds = array<i64: 1, 512>}, {pipeline_mode = #tpu.pipeline_mode<synchronous>, transform_indices = @transform_10, window_bounds = array<i64: 512, 32>}, {pipeline_mode = #tpu.pipeline_mode<synchronous>, transform_indices = @transform_11, window_bounds = array<i64: 32, 1>}, {pipeline_mode = #tpu.pipeline_mode<synchronous>, transform_indices = @transform_12, window_bounds = array<i64: 5, 512>}, {transform_indices = @transform_13, window_bounds = array<i64: 1, 1, 16>}, {transform_indices = @transform_14, window_bounds = array<i64: 1, 16, 1>}]} {
    %c0 = arith.constant 0 : index
    %c0_0 = arith.constant 0 : index
    %0 = vector.load %arg13[%c0, %c0_0] : memref<5x512xf32, #tpu.memory_space<vmem>>, vector<1x128xf32>
    %c1 = arith.constant 1 : index
    %c0_1 = arith.constant 0 : index
    %1 = vector.load %arg13[%c1, %c0_1] : memref<5x512xf32, #tpu.memory_space<vmem>>, vector<1x512xf32>
    %c2 = arith.constant 2 : index
    %c0_2 = arith.constant 0 : index
    %2 = vector.load %arg13[%c2, %c0_2] : memref<5x512xf32, #tpu.memory_space<vmem>>, vector<1x16xf32>
    %c3 = arith.constant 3 : index
    %c0_3 = arith.constant 0 : index
    %3 = vector.load %arg13[%c3, %c0_3] : memref<5x512xf32, #tpu.memory_space<vmem>>, vector<1x32xf32>
    %c4 = arith.constant 4 : index
    %c0_4 = arith.constant 0 : index
    %4 = vector.load %arg13[%c4, %c0_4] : memref<5x512xf32, #tpu.memory_space<vmem>>, vector<1x1xf32>
    %c0_5 = arith.constant 0 : index
    %c0_6 = arith.constant 0 : index
    %c0_7 = arith.constant 0 : index
    %5 = vector.load %arg1[%c0_5, %c0_6, %c0_7] : memref<1x1x80xbf16, #tpu.memory_space<vmem>>, vector<1x1x80xbf16>
    %6 = vector.shape_cast %5 : vector<1x1x80xbf16> to vector<1x80xbf16>
    %c0_8 = arith.constant 0 : index
    %c0_9 = arith.constant 0 : index
    %7 = vector.load %arg5[%c0_8, %c0_9] : memref<80x128xbf16, #tpu.memory_space<vmem>>, vector<80x128xbf16>
    %cst = arith.constant dense<0.000000e+00> : vector<1x128xf32>
    %8 = tpu.matmul %6, %7, %cst {dimension_numbers = #tpu.dot_dimension_numbers<[1], [0], [0], [1], [0, 0, 1, 1], [], []>} : vector<1x80xbf16>, vector<80x128xbf16>, vector<1x128xf32> -> vector<1x128xf32>
    %9 = arith.addf %8, %0 : vector<1x128xf32>
    %cst_10 = arith.constant 0.000000e+00 : f32
    %10 = vector.broadcast %cst_10 : f32 to vector<1x128xf32>
    %11 = arith.cmpf ogt, %9, %10 : vector<1x128xf32>
    %cst_11 = arith.constant 0.00999999977 : f32
    %12 = vector.broadcast %cst_11 : f32 to vector<1x128xf32>
    %13 = arith.mulf %12, %9 : vector<1x128xf32>
    %14 = arith.select %11, %9, %13 : vector<1x128xi1>, vector<1x128xf32>
    %15 = arith.truncf %14 : vector<1x128xf32> to vector<1x128xbf16>
    %c0_12 = arith.constant 0 : index
    %c0_13 = arith.constant 0 : index
    %16 = vector.load %arg6[%c0_12, %c0_13] : memref<128x512xbf16, #tpu.memory_space<vmem>>, vector<128x512xbf16>
    %cst_14 = arith.constant dense<0.000000e+00> : vector<1x512xf32>
    %17 = tpu.matmul %15, %16, %cst_14 {dimension_numbers = #tpu.dot_dimension_numbers<[1], [0], [0], [1], [0, 0, 1, 1], [], []>} : vector<1x128xbf16>, vector<128x512xbf16>, vector<1x512xf32> -> vector<1x512xf32>
    %18 = arith.addf %17, %1 : vector<1x512xf32>
    %cst_15 = arith.constant 0.000000e+00 : f32
    %19 = vector.broadcast %cst_15 : f32 to vector<1x512xf32>
    %20 = arith.cmpf ogt, %18, %19 : vector<1x512xf32>
    %cst_16 = arith.constant 0.00999999977 : f32
    %21 = vector.broadcast %cst_16 : f32 to vector<1x512xf32>
    %22 = arith.mulf %21, %18 : vector<1x512xf32>
    %23 = arith.select %20, %18, %22 : vector<1x512xi1>, vector<1x512xf32>
    %24 = arith.truncf %23 : vector<1x512xf32> to vector<1x512xbf16>
    %c0_17 = arith.constant 0 : index
    %c0_18 = arith.constant 0 : index
    %25 = vector.load %arg7[%c0_17, %c0_18] : memref<512x16xbf16, #tpu.memory_space<vmem>>, vector<512x16xbf16>
    %cst_19 = arith.constant dense<0.000000e+00> : vector<1x16xf32>
    %26 = tpu.matmul %24, %25, %cst_19 {dimension_numbers = #tpu.dot_dimension_numbers<[1], [0], [0], [1], [0, 0, 1, 1], [], []>} : vector<1x512xbf16>, vector<512x16xbf16>, vector<1x16xf32> -> vector<1x16xf32>
    %27 = arith.addf %26, %2 : vector<1x16xf32>
    %cst_20 = arith.constant 0.000000e+00 : f32
    %28 = vector.broadcast %cst_20 : f32 to vector<1x16xf32>
    %29 = arith.subf %28, %27 : vector<1x16xf32>
    %30 = math.exp %29 : vector<1x16xf32>
    %cst_21 = arith.constant 1.000000e+00 : f32
    %31 = vector.broadcast %cst_21 : f32 to vector<1x16xf32>
    %32 = arith.addf %31, %30 : vector<1x16xf32>
    %33 = tpu.reciprocal %32 {approx = true} : vector<1x16xf32> -> vector<1x16xf32>
    %cst_22 = arith.constant 1.500000e+00 : f32
    %34 = vector.broadcast %cst_22 : f32 to vector<1x16xf32>
    %35 = arith.mulf %34, %33 : vector<1x16xf32>
    %cst_23 = arith.constant -5.000000e-01 : f32
    %36 = vector.broadcast %cst_23 : f32 to vector<1x16xf32>
    %37 = arith.addf %35, %36 : vector<1x16xf32>
    %c0_24 = arith.constant 0 : index
    %c0_25 = arith.constant 0 : index
    %c0_26 = arith.constant 0 : index
    %38 = vector.load %arg14[%c0_24, %c0_25, %c0_26] : memref<1x1x16xf32, #tpu.memory_space<vmem>>, vector<1x1x16xf32>
    %39 = vector.shape_cast %38 : vector<1x1x16xf32> to vector<1x16xf32>
    %40 = vector.shape_cast %37 : vector<1x16xf32> to vector<1x1x16xf32>
    tpu.vector_store %arg14[%c0_24, %c0_25, %c0_26], %40 {strides = array<i32>} : memref<1x1x16xf32, #tpu.memory_space<vmem>>, vector<1x1x16xf32>,
    %c0_27 = arith.constant 0 : index
    %c0_28 = arith.constant 0 : index
    %c0_29 = arith.constant 0 : index
    %41 = vector.load %arg2[%c0_27, %c0_28, %c0_29] : memref<1x16x16xbf16, #tpu.memory_space<vmem>>, vector<1x16x16xbf16>
    %42 = vector.shape_cast %41 : vector<1x16x16xbf16> to vector<16x16xbf16>
    %c0_30 = arith.constant 0 : index
    %c0_31 = arith.constant 0 : index
    %43 = vector.load %arg8[%c0_30, %c0_31] : memref<16x512xbf16, #tpu.memory_space<vmem>>, vector<16x512xbf16>
    %cst_32 = arith.constant dense<0.000000e+00> : vector<16x512xf32>
    %44 = tpu.matmul %42, %43, %cst_32 {dimension_numbers = #tpu.dot_dimension_numbers<[1], [0], [0], [1], [0, 0, 1, 1], [], []>} : vector<16x16xbf16>, vector<16x512xbf16>, vector<16x512xf32> -> vector<16x512xf32>
    %45 = arith.truncf %37 : vector<1x16xf32> to vector<1x16xbf16>
    %c0_33 = arith.constant 0 : index
    %c0_34 = arith.constant 0 : index
    %46 = vector.load %arg9[%c0_33, %c0_34] : memref<16x512xbf16, #tpu.memory_space<vmem>>, vector<16x512xbf16>
    %cst_35 = arith.constant dense<0.000000e+00> : vector<1x512xf32>
    %47 = tpu.matmul %45, %46, %cst_35 {dimension_numbers = #tpu.dot_dimension_numbers<[1], [0], [0], [1], [0, 0, 1, 1], [], []>} : vector<1x16xbf16>, vector<16x512xbf16>, vector<1x512xf32> -> vector<1x512xf32>
    %48 = vector.broadcast %47 : vector<1x512xf32> to vector<16x512xf32>
    %49 = arith.addf %44, %48 : vector<16x512xf32>
    %c0_36 = arith.constant 0 : index
    %c0_37 = arith.constant 0 : index
    %c0_38 = arith.constant 0 : index
    %50 = vector.load %arg3[%c0_36, %c0_37, %c0_38] : memref<1x16x1xf32, #tpu.memory_space<vmem>>, vector<1x16x1xf32>
    %51 = vector.shape_cast %50 : vector<1x16x1xf32> to vector<16x1xf32>
    %c0_39 = arith.constant 0 : index
    %c0_40 = arith.constant 0 : index
    %52 = vector.load %arg10[%c0_39, %c0_40] : memref<1x512xf32, #tpu.memory_space<vmem>>, vector<1x512xf32>
    %53 = vector.broadcast %51 : vector<16x1xf32> to vector<16x512xf32>
    %54 = vector.broadcast %52 : vector<1x512xf32> to vector<16x512xf32>
    %55 = arith.mulf %53, %54 : vector<16x512xf32>
    %56 = arith.addf %49, %55 : vector<16x512xf32>
    %c0_41 = arith.constant 0 : index
    %c0_42 = arith.constant 0 : index
    %c0_43 = arith.constant 0 : index
    %57 = vector.load %arg4[%c0_41, %c0_42, %c0_43] : memref<1x1x512xf32, #tpu.memory_space<vmem>>, vector<1x1x512xf32>
    %58 = vector.shape_cast %57 : vector<1x1x512xf32> to vector<1x512xf32>
    %59 = vector.broadcast %58 : vector<1x512xf32> to vector<16x512xf32>
    %60 = arith.addf %56, %59 : vector<16x512xf32>
    %cst_44 = arith.constant 0.000000e+00 : f32
    %61 = vector.broadcast %cst_44 : f32 to vector<16x512xf32>
    %62 = arith.cmpf ogt, %60, %61 : vector<16x512xf32>
    %cst_45 = arith.constant 0.00999999977 : f32
    %63 = vector.broadcast %cst_45 : f32 to vector<16x512xf32>
    %64 = arith.mulf %63, %60 : vector<16x512xf32>
    %65 = arith.select %62, %60, %64 : vector<16x512xi1>, vector<16x512xf32>
    %66 = arith.truncf %65 : vector<16x512xf32> to vector<16x512xbf16>
    %c0_46 = arith.constant 0 : index
    %c0_47 = arith.constant 0 : index
    %67 = vector.load %arg11[%c0_46, %c0_47] : memref<512x32xbf16, #tpu.memory_space<vmem>>, vector<512x32xbf16>
    %cst_48 = arith.constant dense<0.000000e+00> : vector<16x32xf32>
    %68 = tpu.matmul %66, %67, %cst_48 {dimension_numbers = #tpu.dot_dimension_numbers<[1], [0], [0], [1], [0, 0, 1, 1], [], []>} : vector<16x512xbf16>, vector<512x32xbf16>, vector<16x32xf32> -> vector<16x32xf32>
    %69 = vector.broadcast %3 : vector<1x32xf32> to vector<16x32xf32>
    %70 = arith.addf %68, %69 : vector<16x32xf32>
    %cst_49 = arith.constant 0.000000e+00 : f32
    %71 = vector.broadcast %cst_49 : f32 to vector<16x32xf32>
    %72 = arith.cmpf ogt, %70, %71 : vector<16x32xf32>
    %cst_50 = arith.constant 0.00999999977 : f32
    %73 = vector.broadcast %cst_50 : f32 to vector<16x32xf32>
    %74 = arith.mulf %73, %70 : vector<16x32xf32>
    %75 = arith.select %72, %70, %74 : vector<16x32xi1>, vector<16x32xf32>
    %76 = arith.truncf %75 : vector<16x32xf32> to vector<16x32xbf16>
    %c0_51 = arith.constant 0 : index
    %c0_52 = arith.constant 0 : index
    %77 = vector.load %arg12[%c0_51, %c0_52] : memref<32x1xbf16, #tpu.memory_space<vmem>>, vector<32x1xbf16>
    %cst_53 = arith.constant dense<0.000000e+00> : vector<16x1xf32>
    %78 = tpu.matmul %76, %77, %cst_53 {dimension_numbers = #tpu.dot_dimension_numbers<[1], [0], [0], [1], [0, 0, 1, 1], [], []>} : vector<16x32xbf16>, vector<32x1xbf16>, vector<16x1xf32> -> vector<16x1xf32>
    %79 = vector.broadcast %4 : vector<1x1xf32> to vector<16x1xf32>
    %80 = arith.addf %78, %79 : vector<16x1xf32>
    %c0_54 = arith.constant 0 : index
    %c0_55 = arith.constant 0 : index
    %c0_56 = arith.constant 0 : index
    %81 = vector.load %arg15[%c0_54, %c0_55, %c0_56] : memref<1x16x1xf32, #tpu.memory_space<vmem>>, vector<1x16x1xf32>
    %82 = vector.shape_cast %81 : vector<1x16x1xf32> to vector<16x1xf32>
    %83 = vector.shape_cast %80 : vector<16x1xf32> to vector<1x16x1xf32>
    tpu.vector_store %arg15[%c0_54, %c0_55, %c0_56], %83 {strides = array<i32>} : memref<1x16x1xf32, #tpu.memory_space<vmem>>, vector<1x16x1xf32>,
    return
  }
  func.func @transform_0(%arg0: i32) -> (i32, i32, i32) {
    %c0_i32 = arith.constant 0 : i32
    %c0_i32_0 = arith.constant 0 : i32
    %c0_i32_1 = arith.constant 0 : i32
    return %arg0, %c0_i32, %c0_i32_0 : i32, i32, i32
  }
  func.func @transform_1(%arg0: i32) -> (i32, i32, i32) {
    %c0_i32 = arith.constant 0 : i32
    %c0_i32_0 = arith.constant 0 : i32
    %c0_i32_1 = arith.constant 0 : i32
    return %arg0, %c0_i32, %c0_i32_0 : i32, i32, i32
  }
  func.func @transform_2(%arg0: i32) -> (i32, i32, i32) {
    %c0_i32 = arith.constant 0 : i32
    %c0_i32_0 = arith.constant 0 : i32
    %c0_i32_1 = arith.constant 0 : i32
    return %arg0, %c0_i32, %c0_i32_0 : i32, i32, i32
  }
  func.func @transform_3(%arg0: i32) -> (i32, i32, i32) {
    %c0_i32 = arith.constant 0 : i32
    %c0_i32_0 = arith.constant 0 : i32
    %c0_i32_1 = arith.constant 0 : i32
    return %arg0, %c0_i32, %c0_i32_0 : i32, i32, i32
  }
  func.func @transform_4(%arg0: i32) -> (i32, i32) {
    %c0_i32 = arith.constant 0 : i32
    %c0_i32_0 = arith.constant 0 : i32
    %c0_i32_1 = arith.constant 0 : i32
    return %c0_i32, %c0_i32_0 : i32, i32
  }
  func.func @transform_5(%arg0: i32) -> (i32, i32) {
    %c0_i32 = arith.constant 0 : i32
    %c0_i32_0 = arith.constant 0 : i32
    %c0_i32_1 = arith.constant 0 : i32
    return %c0_i32, %c0_i32_0 : i32, i32
  }
  func.func @transform_6(%arg0: i32) -> (i32, i32) {
    %c0_i32 = arith.constant 0 : i32
    %c0_i32_0 = arith.constant 0 : i32
    %c0_i32_1 = arith.constant 0 : i32
    return %c0_i32, %c0_i32_0 : i32, i32
  }
  func.func @transform_7(%arg0: i32) -> (i32, i32) {
    %c0_i32 = arith.constant 0 : i32
    %c0_i32_0 = arith.constant 0 : i32
    %c0_i32_1 = arith.constant 0 : i32
    return %c0_i32, %c0_i32_0 : i32, i32
  }
  func.func @transform_8(%arg0: i32) -> (i32, i32) {
    %c0_i32 = arith.constant 0 : i32
    %c0_i32_0 = arith.constant 0 : i32
    %c0_i32_1 = arith.constant 0 : i32
    return %c0_i32, %c0_i32_0 : i32, i32
  }
  func.func @transform_9(%arg0: i32) -> (i32, i32) {
    %c0_i32 = arith.constant 0 : i32
    %c0_i32_0 = arith.constant 0 : i32
    %c0_i32_1 = arith.constant 0 : i32
    return %c0_i32, %c0_i32_0 : i32, i32
  }
  func.func @transform_10(%arg0: i32) -> (i32, i32) {
    %c0_i32 = arith.constant 0 : i32
    %c0_i32_0 = arith.constant 0 : i32
    %c0_i32_1 = arith.constant 0 : i32
    return %c0_i32, %c0_i32_0 : i32, i32
  }
  func.func @transform_11(%arg0: i32) -> (i32, i32) {
    %c0_i32 = arith.constant 0 : i32
    %c0_i32_0 = arith.constant 0 : i32
    %c0_i32_1 = arith.constant 0 : i32
    return %c0_i32, %c0_i32_0 : i32, i32
  }
  func.func @transform_12(%arg0: i32) -> (i32, i32) {
    %c0_i32 = arith.constant 0 : i32
    %c0_i32_0 = arith.constant 0 : i32
    %c0_i32_1 = arith.constant 0 : i32
    return %c0_i32, %c0_i32_0 : i32, i32
  }
  func.func @transform_13(%arg0: i32) -> (i32, i32, i32) {
    %c0_i32 = arith.constant 0 : i32
    %c0_i32_0 = arith.constant 0 : i32
    %c0_i32_1 = arith.constant 0 : i32
    return %arg0, %c0_i32, %c0_i32_0 : i32, i32, i32
  }
  func.func @transform_14(%arg0: i32) -> (i32, i32, i32) {
    %c0_i32 = arith.constant 0 : i32
    %c0_i32_0 = arith.constant 0 : i32
    %c0_i32_1 = arith.constant 0 : i32
    return %arg0, %c0_i32, %c0_i32_0 : i32, i32, i32
  }
}

</mosaic_0001>

<llo_original>
// kernel: tpu_custom_call.1
$region0: #{tpu_custom_call.1}
  #allocation0 [shape = 'u32[]', space=smem, size = 0x4, offset = 0x4, fixed_abs, tag = 'smem constant byte address 0x4 - core index']
  #allocation1 [shape = 'u32[144,128]{1,0:T(1,128)}', space=vmem, size = 0x12000, scoped, tag = 'internal scratch']
  %s0 = inlined_call_operand.vmem [shape: bf16[1,1,80], index: 0, kind: input, shape index: {}]
  %s1 = inlined_call_operand.vmem [shape: bf16[1,16,16], index: 1, kind: input, shape index: {}]
  %s2 = inlined_call_operand.vmem [shape: f32[1,16,1], index: 2, kind: input, shape index: {}]
  %s3 = inlined_call_operand.vmem [shape: f32[1,1,512], index: 3, kind: input, shape index: {}]
  %s4 = inlined_call_operand.vmem [shape: bf16[80,128], index: 4, kind: input, shape index: {}]
  %s5 = inlined_call_operand.vmem [shape: bf16[128,512], index: 5, kind: input, shape index: {}]
  %s6 = inlined_call_operand.vmem [shape: bf16[512,16], index: 6, kind: input, shape index: {}]
  %s7 = inlined_call_operand.vmem [shape: bf16[16,512], index: 7, kind: input, shape index: {}]
  %s8 = inlined_call_operand.vmem [shape: bf16[16,512], index: 8, kind: input, shape index: {}]
  %s9 = inlined_call_operand.vmem [shape: f32[1,512], index: 9, kind: input, shape index: {}]
  %s10 = inlined_call_operand.vmem [shape: bf16[512,32], index: 10, kind: input, shape index: {}]
  %s11 = inlined_call_operand.vmem [shape: bf16[32,1], index: 11, kind: input, shape index: {}]
  %s12 = inlined_call_operand.vmem [shape: f32[5,512], index: 12, kind: input, shape index: {}]
  %s13 = inlined_call_operand.hbm [shape: f32[1,1,16], index: 13, kind: output, shape index: {0}]
  %s14 = inlined_call_operand.vmem [shape: f32[1,16,1], index: 14, kind: output, shape index: {1}]
  %15 = xla_tuple %s13, %s14
  %s16 = sld [smem:[#allocation0]]
  $region70: #{tpu_custom_call.1} parent=0
    _
  %s18 = ssub.s32 1, %s16
  %s19 = scalar_select 0, %s18, %s16
  $region1: #{tpu_custom_call.1} parent=0
    #allocation2 [shape = 'u8[512]{0}', space=vmem, size = 0x400, scoped, tag = 'output window, operand 0, single buffered']
    #allocation3 [shape = 's32[1]{0}', space=sflag, size = 0x4, scoped, tag = 'scoped memory for tpu_custom_call.1']
    %20 = vsyncpa [#allocation3], 0
    // Predicated region
    $region2: #{tpu_custom_call.1} parent=1 // pred_check
      _
    $region3: #{tpu_custom_call.1} parent=1 // pred_check_branch
      %22 = sbr.rel (0) target = $region5
    $region4: #{tpu_custom_call.1} parent=1 // pred_region
      _
    $region5: #{tpu_custom_call.1} parent=1 // pred_fallthru
      _
    // Predicated region
    $region6: #{tpu_custom_call.1} parent=1 // pred_check
      _
    $region7: #{tpu_custom_call.1} parent=1 // pred_check_branch
      %24 = sbr.rel (0) target = $region9
    $region8: #{tpu_custom_call.1} parent=1 // pred_region
      _
    $region9: #{tpu_custom_call.1} parent=1 // pred_fallthru
      _
    // Predicated region
    $region10: #{tpu_custom_call.1} parent=1 // pred_check
      _
    $region11: #{tpu_custom_call.1} parent=1 // pred_check_branch
      %26 = sbr.rel (0) target = $region13
    $region12: #{tpu_custom_call.1} parent=1 // pred_region
      _
    $region13: #{tpu_custom_call.1} parent=1 // pred_fallthru
      _
    // Predicated region
    $region14: #{tpu_custom_call.1} parent=1 // pred_check
      _
    $region15: #{tpu_custom_call.1} parent=1 // pred_check_branch
      %28 = sbr.rel (0) target = $region17
    $region16: #{tpu_custom_call.1} parent=1 // pred_region
      _
    $region17: #{tpu_custom_call.1} parent=1 // pred_fallthru
      _
    // Predicated region
    $region18: #{tpu_custom_call.1} parent=1 // pred_check
      _
    $region19: #{tpu_custom_call.1} parent=1 // pred_check_branch
      %30 = sbr.rel (0) target = $region21
    $region20: #{tpu_custom_call.1} parent=1 // pred_region
      _
    $region21: #{tpu_custom_call.1} parent=1 // pred_fallthru
      _
    // Predicated region
    $region22: #{tpu_custom_call.1} parent=1 // pred_check
      _
    $region23: #{tpu_custom_call.1} parent=1 // pred_check_branch
      %32 = sbr.rel (0) target = $region25
    $region24: #{tpu_custom_call.1} parent=1 // pred_region
      _
    $region25: #{tpu_custom_call.1} parent=1 // pred_fallthru
      _
    // Predicated region
    $region26: #{tpu_custom_call.1} parent=1 // pred_check
      _
    $region27: #{tpu_custom_call.1} parent=1 // pred_check_branch
      %34 = sbr.rel (0) target = $region29
    $region28: #{tpu_custom_call.1} parent=1 // pred_region
      _
    $region29: #{tpu_custom_call.1} parent=1 // pred_fallthru
      _
    // Predicated region
    $region30: #{tpu_custom_call.1} parent=1 // pred_check
      _
    $region31: #{tpu_custom_call.1} parent=1 // pred_check_branch
      %36 = sbr.rel (0) target = $region33
    $region32: #{tpu_custom_call.1} parent=1 // pred_region
      _
    $region33: #{tpu_custom_call.1} parent=1 // pred_fallthru
      _
    // Predicated region
    $region34: #{tpu_custom_call.1} parent=1 // pred_check
      _
    $region35: #{tpu_custom_call.1} parent=1 // pred_check_branch
      %38 = sbr.rel (0) target = $region37
    $region36: #{tpu_custom_call.1} parent=1 // pred_region
      _
    $region37: #{tpu_custom_call.1} parent=1 // pred_fallthru
      _
    // Predicated region
    $region38: #{tpu_custom_call.1} parent=1 // pred_check
      _
    $region39: #{tpu_custom_call.1} parent=1 // pred_check_branch
      %40 = sbr.rel (0) target = $region41
    $region40: #{tpu_custom_call.1} parent=1 // pred_region
      _
    $region41: #{tpu_custom_call.1} parent=1 // pred_fallthru
      _
    // Predicated region
    $region42: #{tpu_custom_call.1} parent=1 // pred_check
      _
    $region43: #{tpu_custom_call.1} parent=1 // pred_check_branch
      %42 = sbr.rel (0) target = $region45
    $region44: #{tpu_custom_call.1} parent=1 // pred_region
      _
    $region45: #{tpu_custom_call.1} parent=1 // pred_fallthru
      _
    // Predicated region
    $region46: #{tpu_custom_call.1} parent=1 // pred_check
      _
    $region47: #{tpu_custom_call.1} parent=1 // pred_check_branch
      %44 = sbr.rel (0) target = $region49
    $region48: #{tpu_custom_call.1} parent=1 // pred_region
      _
    $region49: #{tpu_custom_call.1} parent=1 // pred_fallthru
      _
    // Predicated region
    $region50: #{tpu_custom_call.1} parent=1 // pred_check
      _
    $region51: #{tpu_custom_call.1} parent=1 // pred_check_branch
      %46 = sbr.rel (0) target = $region53
    $region52: #{tpu_custom_call.1} parent=1 // pred_region
      _
    $region53: #{tpu_custom_call.1} parent=1 // pred_fallthru
      _
    %v48 = vld [vmem:[%s12] ss:$0 sm:$0xff]
    %s49 = scalar_lea.vmem %s12, 1
    %v50 = vld [vmem:[%s49] ss:$8 sm:$0xf]
    %v51 = vld [vmem:[%s12 + $0x2] ss:$0 sm:$0xff]
    %v52 = vld [vmem:[%s12 + $0x3] ss:$0 sm:$0xff]
    %v53 = vld [vmem:[%s12 + $0x4] ss:$0 sm:$0xff]
    %v54 = vld [vmem:[%s0] sm:$0x1]
    %v55 = vld [vmem:[%s4] sm:$0xf]
    %v56 = vld [vmem:[%s4 + $0x4] sm:$0xf]
    %v57 = vld [vmem:[%s4 + $0x8] sm:$0xf]
    %v58 = vld [vmem:[%s4 + $0xc] sm:$0xf]
    %v59 = vld [vmem:[%s4 + $0x10] sm:$0xf]
    %v60 = vld [vmem:[%s4 + $0x14] sm:$0xf]
    %v61 = vld [vmem:[%s4 + $0x18] sm:$0xf]
    %v62 = vld [vmem:[%s4 + $0x1c] sm:$0xf]
    %v63 = vld [vmem:[%s4 + $0x20] sm:$0xf]
    %v64 = vld [vmem:[%s4 + $0x24] sm:$0xf]
    %v75 = vunpack.c.l.b16 %v55
    %v76 = vunpack.c.l.b16 %v56
    %v77 = vunpack.c.l.b16 %v57
    %v78 = vunpack.c.l.b16 %v58
    %v79 = vunpack.c.l.b16 %v59
    %v80 = vunpack.c.l.b16 %v60
    %v81 = vunpack.c.l.b16 %v61
    %v82 = vunpack.c.l.b16 %v62
    %v83 = vunpack.c.l.b16 %v63
    %v84 = vunpack.c.l.b16 %v64
    %v85 = vpack.c.b16 %v76, %v75
    %v86 = vpack.c.b16 %v78, %v77
    %v87 = vpack.c.b16 %v80, %v79
    %v88 = vpack.c.b16 %v82, %v81
    %v89 = vpack.c.b16 %v84, %v83
    %vm95 = vcmask 654336
    %v97 = vsel %vm95, %v54, 0
    %99 = vmatprep.subr.bf16.mxu0 0
    %100 = vmatpush1.bf16.msra.mxu0 %v85
    %101 = vmatprep.subr.bf16.mxu0 0
    %102 = vmatpush1.bf16.msra.mxu0 %v86
    %103 = vmatprep.subr.bf16.mxu0 0
    %104 = vmatpush1.bf16.msra.mxu0 %v87
    %105 = vmatprep.subr.bf16.mxu0 0
    %106 = vmatpush1.bf16.msra.mxu0 %v88
    %107 = vmatprep.subr.bf16.mxu0 0
    %108 = vmatpush1.bf16.msra.mxu0 %v89
    %109 = vmatprep.subr.bf16.mxu0 0
    %110 = vmatpush1.bf16.msra.mxu0 0
    %111 = vmatprep.subr.bf16.mxu0 0
    %112 = vmatpush1.bf16.msra.mxu0 0
    %113 = vmatprep.subr.bf16.mxu0 0
    %114 = vmatpush1.bf16.msra.mxu0 0
    %115 = vmatprep.subr.bf16.mxu0 0
    %116 = vmatpush1.bf16.msra.mxu0 0
    %117 = vmatprep.subr.bf16.mxu0 0
    %118 = vmatpush1.bf16.msra.mxu0 0
    %119 = vmatprep.subr.bf16.mxu0 0
    %120 = vmatpush1.bf16.msra.mxu0 0
    %121 = vmatprep.subr.bf16.mxu0 0
    %122 = vmatpush1.bf16.msra.mxu0 0
    %123 = vmatprep.subr.bf16.mxu0 0
    %124 = vmatpush1.bf16.msra.mxu0 0
    %125 = vmatprep.subr.bf16.mxu0 0
    %126 = vmatpush1.bf16.msra.mxu0 0
    %127 = vmatprep.subr.bf16.mxu0 0
    %128 = vmatpush1.bf16.msra.mxu0 0
    %129 = vmatprep.subr.bf16.mxu0 0
    %130 = vmatpush1.bf16.msra.mxu0 0
    %131 = vmatprep.mubr.bf16.mxu0 0
    %132 = vmatmul.mubr.bf16.gmra.mrb[0].mxu0 %v97
    %v133 = vpop.f32.mrb[0].mxu0
    %v134 = vadd.f32 %v48, %v133
    %v135 = vpop.f32.mrb[0].mxu0
    %v136 = vpop.f32.mrb[0].mxu0
    %v137 = vpop.f32.mrb[0].mxu0
    %138 = vdwg.mxu0
    %vm139 = vcmp.gt.f32.partialorder %v134, 0.0
    %v140 = vmul.f32 %v134, 0.01
    %v141 = vsel %vm139, %v134, %v140
    %v142 = vpack.c.bf16 %v141, %v141
    %v143 = vld [vmem:[%s5] sm:$0xff]
    %v144 = vld [vmem:[%s5 + $0x8] sm:$0xff]
    %v145 = vld [vmem:[%s5 + $0x10] sm:$0xff]
    %v146 = vld [vmem:[%s5 + $0x18] sm:$0xff]
    %v147 = vld [vmem:[%s5 + $0x20] sm:$0xff]
    %v148 = vld [vmem:[%s5 + $0x28] sm:$0xff]
    %v149 = vld [vmem:[%s5 + $0x30] sm:$0xff]
    %v150 = vld [vmem:[%s5 + $0x38] sm:$0xff]
    %v151 = vld [vmem:[%s5 + $0x40] sm:$0xff]
    %v152 = vld [vmem:[%s5 + $0x48] sm:$0xff]
    %v153 = vld [vmem:[%s5 + $0x50] sm:$0xff]
    %v154 = vld [vmem:[%s5 + $0x58] sm:$0xff]
    %v155 = vld [vmem:[%s5 + $0x60] sm:$0xff]
    %v156 = vld [vmem:[%s5 + $0x68] sm:$0xff]
    %v157 = vld [vmem:[%s5 + $0x70] sm:$0xff]
    %v158 = vld [vmem:[%s5 + $0x78] sm:$0xff]
    %v159 = vld [vmem:[%s5 + $0x80] sm:$0xff]
    %v160 = vld [vmem:[%s5 + $0x88] sm:$0xff]
    %v161 = vld [vmem:[%s5 + $0x90] sm:$0xff]
    %v162 = vld [vmem:[%s5 + $0x98] sm:$0xff]
    %v163 = vld [vmem:[%s5 + $0xa0] sm:$0xff]
    %v164 = vld [vmem:[%s5 + $0xa8] sm:$0xff]
    %v165 = vld [vmem:[%s5 + $0xb0] sm:$0xff]
    %v166 = vld [vmem:[%s5 + $0xb8] sm:$0xff]
    %v167 = vld [vmem:[%s5 + $0xc0] sm:$0xff]
    %v168 = vld [vmem:[%s5 + $0xc8] sm:$0xff]
    %v169 = vld [vmem:[%s5 + $0xd0] sm:$0xff]
    %v170 = vld [vmem:[%s5 + $0xd8] sm:$0xff]
    %v171 = vld [vmem:[%s5 + $0xe0] sm:$0xff]
    %v172 = vld [vmem:[%s5 + $0xe8] sm:$0xff]
    %v173 = vld [vmem:[%s5 + $0xf0] sm:$0xff]
    %v174 = vld [vmem:[%s5 + $0xf8] sm:$0xff]
    %v207 = vunpack.c.l.b16 %v143
    %v208 = vunpack.c.h.b16 %v143
    %v209 = vunpack.c.l.b16 %v144
    %v210 = vunpack.c.h.b16 %v144
    %v211 = vunpack.c.l.b16 %v145
    %v212 = vunpack.c.h.b16 %v145
    %v213 = vunpack.c.l.b16 %v146
    %v214 = vunpack.c.h.b16 %v146
    %v215 = vunpack.c.l.b16 %v147
    %v216 = vunpack.c.h.b16 %v147
    %v217 = vunpack.c.l.b16 %v148
    %v218 = vunpack.c.h.b16 %v148
    %v219 = vunpack.c.l.b16 %v149
    %v220 = vunpack.c.h.b16 %v149
    %v221 = vunpack.c.l.b16 %v150
    %v222 = vunpack.c.h.b16 %v150
    %v223 = vunpack.c.l.b16 %v151
    %v224 = vunpack.c.h.b16 %v151
    %v225 = vunpack.c.l.b16 %v152
    %v226 = vunpack.c.h.b16 %v152
    %v227 = vunpack.c.l.b16 %v153
    %v228 = vunpack.c.h.b16 %v153
    %v229 = vunpack.c.l.b16 %v154
    %v230 = vunpack.c.h.b16 %v154
    %v231 = vunpack.c.l.b16 %v155
    %v232 = vunpack.c.h.b16 %v155
    %v233 = vunpack.c.l.b16 %v156
    %v234 = vunpack.c.h.b16 %v156
    %v235 = vunpack.c.l.b16 %v157
    %v236 = vunpack.c.h.b16 %v157
    %v237 = vunpack.c.l.b16 %v158
    %v238 = vunpack.c.h.b16 %v158
    %v239 = vunpack.c.l.b16 %v159
    %v240 = vunpack.c.h.b16 %v159
    %v241 = vunpack.c.l.b16 %v160
    %v242 = vunpack.c.h.b16 %v160
    %v243 = vunpack.c.l.b16 %v161
    %v244 = vunpack.c.h.b16 %v161
    %v245 = vunpack.c.l.b16 %v162
    %v246 = vunpack.c.h.b16 %v162
    %v247 = vunpack.c.l.b16 %v163
    %v248 = vunpack.c.h.b16 %v163
    %v249 = vunpack.c.l.b16 %v164
    %v250 = vunpack.c.h.b16 %v164
    %v251 = vunpack.c.l.b16 %v165
    %v252 = vunpack.c.h.b16 %v165
    %v253 = vunpack.c.l.b16 %v166
    %v254 = vunpack.c.h.b16 %v166
    %v255 = vunpack.c.l.b16 %v167
    %v256 = vunpack.c.h.b16 %v167
    %v257 = vunpack.c.l.b16 %v168
    %v258 = vunpack.c.h.b16 %v168
    %v259 = vunpack.c.l.b16 %v169
    %v260 = vunpack.c.h.b16 %v169
    %v261 = vunpack.c.l.b16 %v170
    %v262 = vunpack.c.h.b16 %v170
    %v263 = vunpack.c.l.b16 %v171
    %v264 = vunpack.c.h.b16 %v171
    %v265 = vunpack.c.l.b16 %v172
    %v266 = vunpack.c.h.b16 %v172
    %v267 = vunpack.c.l.b16 %v173
    %v268 = vunpack.c.h.b16 %v173
    %v269 = vunpack.c.l.b16 %v174
    %v270 = vunpack.c.h.b16 %v174
    %v271 = vpack.c.b16 %v211, %v207
    %v272 = vpack.c.b16 %v212, %v208
    %v273 = vpack.c.b16 %v213, %v209
    %v274 = vpack.c.b16 %v214, %v210
    %v275 = vpack.c.b16 %v219, %v215
    %v276 = vpack.c.b16 %v220, %v216
    %v277 = vpack.c.b16 %v221, %v217
    %v278 = vpack.c.b16 %v222, %v218
    %v279 = vpack.c.b16 %v227, %v223
    %v280 = vpack.c.b16 %v228, %v224
    %v281 = vpack.c.b16 %v229, %v225
    %v282 = vpack.c.b16 %v230, %v226
    %v283 = vpack.c.b16 %v235, %v231
    %v284 = vpack.c.b16 %v236, %v232
    %v285 = vpack.c.b16 %v237, %v233
    %v286 = vpack.c.b16 %v238, %v234
    %v287 = vpack.c.b16 %v243, %v239
    %v288 = vpack.c.b16 %v244, %v240
    %v289 = vpack.c.b16 %v245, %v241
    %v290 = vpack.c.b16 %v246, %v242
    %v291 = vpack.c.b16 %v251, %v247
    %v292 = vpack.c.b16 %v252, %v248
    %v293 = vpack.c.b16 %v253, %v249
    %v294 = vpack.c.b16 %v254, %v250
    %v295 = vpack.c.b16 %v259, %v255
    %v296 = vpack.c.b16 %v260, %v256
    %v297 = vpack.c.b16 %v261, %v257
    %v298 = vpack.c.b16 %v262, %v258
    %v299 = vpack.c.b16 %v267, %v263
    %v300 = vpack.c.b16 %v268, %v264
    %v301 = vpack.c.b16 %v269, %v265
    %v302 = vpack.c.b16 %v270, %v266
    %v336 = vlaneseq
    %v337 = vshrl.u32 %v336, 7
    %v338 = vsub.s32 0, %v337
    %v339 = vrot.slane %v50, %v338
    %v340 = vlaneseq
    %v341 = vshrl.u32 %v340, 7
    %v342 = vsub.s32 1, %v341
    %v343 = vrot.slane %v50, %v342
    %v344 = vlaneseq
    %v345 = vshrl.u32 %v344, 7
    %v346 = vsub.s32 2, %v345
    %v347 = vrot.slane %v50, %v346
    %v348 = vlaneseq
    %v349 = vshrl.u32 %v348, 7
    %v350 = vsub.s32 3, %v349
    %v351 = vrot.slane %v50, %v350
    %356 = vmatprep.subr.bf16.mxu0 %v272
    %357 = vmatpush1.bf16.msra.mxu0 %v271
    %358 = vmatprep.subr.bf16.mxu0 %v276
    %359 = vmatpush1.bf16.msra.mxu0 %v275
    %360 = vmatprep.subr.bf16.mxu0 %v280
    %361 = vmatpush1.bf16.msra.mxu0 %v279
    %362 = vmatprep.subr.bf16.mxu0 %v284
    %363 = vmatpush1.bf16.msra.mxu0 %v283
    %364 = vmatprep.subr.bf16.mxu0 %v288
    %365 = vmatpush1.bf16.msra.mxu0 %v287
    %366 = vmatprep.subr.bf16.mxu0 %v292
    %367 = vmatpush1.bf16.msra.mxu0 %v291
    %368 = vmatprep.subr.bf16.mxu0 %v296
    %369 = vmatpush1.bf16.msra.mxu0 %v295
    %370 = vmatprep.subr.bf16.mxu0 %v300
    %371 = vmatpush1.bf16.msra.mxu0 %v299
    %372 = vmatprep.subr.bf16.mxu0 0
    %373 = vmatpush1.bf16.msra.mxu0 0
    %374 = vmatprep.subr.bf16.mxu0 0
    %375 = vmatpush1.bf16.msra.mxu0 0
    %376 = vmatprep.subr.bf16.mxu0 0
    %377 = vmatpush1.bf16.msra.mxu0 0
    %378 = vmatprep.subr.bf16.mxu0 0
    %379 = vmatpush1.bf16.msra.mxu0 0
    %380 = vmatprep.subr.bf16.mxu0 0
    %381 = vmatpush1.bf16.msra.mxu0 0
    %382 = vmatprep.subr.bf16.mxu0 0
    %383 = vmatpush1.bf16.msra.mxu0 0
    %384 = vmatprep.subr.bf16.mxu0 0
    %385 = vmatpush1.bf16.msra.mxu0 0
    %386 = vmatprep.subr.bf16.mxu0 0
    %387 = vmatpush1.bf16.msra.mxu0 0
    %388 = vmatprep.mubr.bf16.mxu0 0
    %389 = vmatmul.mubr.bf16.gmra.mrb[0].mxu0 %v142
    %v390 = vpop.f32.mrb[0].mxu0
    %v391 = vadd.f32 %v339, %v390
    %v392 = vpop.f32.mrb[0].mxu0
    %v393 = vadd.f32 %v343, %v392
    %v394 = vpop.f32.mrb[0].mxu0
    %v395 = vpop.f32.mrb[0].mxu0
    %396 = vdwg.mxu0
    %397 = vmatprep.subr.bf16.mxu0 %v274
    %398 = vmatpush1.bf16.msra.mxu0 %v273
    %399 = vmatprep.subr.bf16.mxu0 %v278
    %400 = vmatpush1.bf16.msra.mxu0 %v277
    %401 = vmatprep.subr.bf16.mxu0 %v282
    %402 = vmatpush1.bf16.msra.mxu0 %v281
    %403 = vmatprep.subr.bf16.mxu0 %v286
    %404 = vmatpush1.bf16.msra.mxu0 %v285
    %405 = vmatprep.subr.bf16.mxu0 %v290
    %406 = vmatpush1.bf16.msra.mxu0 %v289
    %407 = vmatprep.subr.bf16.mxu0 %v294
    %408 = vmatpush1.bf16.msra.mxu0 %v293
    %409 = vmatprep.subr.bf16.mxu0 %v298
    %410 = vmatpush1.bf16.msra.mxu0 %v297
    %411 = vmatprep.subr.bf16.mxu0 %v302
    %412 = vmatpush1.bf16.msra.mxu0 %v301
    %413 = vmatprep.subr.bf16.mxu0 0
    %414 = vmatpush1.bf16.msra.mxu0 0
    %415 = vmatprep.subr.bf16.mxu0 0
    %416 = vmatpush1.bf16.msra.mxu0 0
    %417 = vmatprep.subr.bf16.mxu0 0
    %418 = vmatpush1.bf16.msra.mxu0 0
    %419 = vmatprep.subr.bf16.mxu0 0
    %420 = vmatpush1.bf16.msra.mxu0 0
    %421 = vmatprep.subr.bf16.mxu0 0
    %422 = vmatpush1.bf16.msra.mxu0 0
    %423 = vmatprep.subr.bf16.mxu0 0
    %424 = vmatpush1.bf16.msra.mxu0 0
    %425 = vmatprep.subr.bf16.mxu0 0
    %426 = vmatpush1.bf16.msra.mxu0 0
    %427 = vmatprep.subr.bf16.mxu0 0
    %428 = vmatpush1.bf16.msra.mxu0 0
    %429 = vmatprep.mubr.bf16.mxu0 0
    %430 = vmatmul.mubr.bf16.gmra.mrb[0].mxu0 %v142
    %v431 = vpop.f32.mrb[0].mxu0
    %v432 = vadd.f32 %v347, %v431
    %v433 = vpop.f32.mrb[0].mxu0
    %v434 = vadd.f32 %v351, %v433
    %v435 = vpop.f32.mrb[0].mxu0
    %v436 = vpop.f32.mrb[0].mxu0
    %437 = vdwg.mxu0
    %vm438 = vcmp.gt.f32.partialorder %v391, 0.0
    %vm439 = vcmp.gt.f32.partialorder %v393, 0.0
    %vm440 = vcmp.gt.f32.partialorder %v432, 0.0
    %vm441 = vcmp.gt.f32.partialorder %v434, 0.0
    %v442 = vmul.f32 %v391, 0.01
    %v443 = vmul.f32 %v393, 0.01
    %v444 = vmul.f32 %v432, 0.01
    %v445 = vmul.f32 %v434, 0.01
    %v446 = vsel %vm438, %v391, %v442
    %v447 = vsel %vm439, %v393, %v443
    %v448 = vsel %vm440, %v432, %v444
    %v449 = vsel %vm441, %v434, %v445
    %v450 = vpack.c.bf16 %v446, %v446
    %v451 = vpack.c.bf16 %v447, %v447
    %v452 = vpack.c.bf16 %v448, %v448
    %v453 = vpack.c.bf16 %v449, %v449
    %v454 = vld [vmem:[%s6] sm:$0xf]
    %v455 = vld [vmem:[%s6 + $0x4] sm:$0xf]
    %v456 = vld [vmem:[%s6 + $0x8] sm:$0xf]
    %v457 = vld [vmem:[%s6 + $0xc] sm:$0xf]
    %v458 = vld [vmem:[%s6 + $0x10] sm:$0xf]
    %v459 = vld [vmem:[%s6 + $0x14] sm:$0xf]
    %v460 = vld [vmem:[%s6 + $0x18] sm:$0xf]
    %v461 = vld [vmem:[%s6 + $0x1c] sm:$0xf]
    %v462 = vld [vmem:[%s6 + $0x20] sm:$0xf]
    %v463 = vld [vmem:[%s6 + $0x24] sm:$0xf]
    %v464 = vld [vmem:[%s6 + $0x28] sm:$0xf]
    %v465 = vld [vmem:[%s6 + $0x2c] sm:$0xf]
    %v466 = vld [vmem:[%s6 + $0x30] sm:$0xf]
    %v467 = vld [vmem:[%s6 + $0x34] sm:$0xf]
    %v468 = vld [vmem:[%s6 + $0x38] sm:$0xf]
    %v469 = vld [vmem:[%s6 + $0x3c] sm:$0xf]
    %v470 = vld [vmem:[%s6 + $0x40] sm:$0xf]
    %v471 = vld [vmem:[%s6 + $0x44] sm:$0xf]
    %v472 = vld [vmem:[%s6 + $0x48] sm:$0xf]
    %v473 = vld [vmem:[%s6 + $0x4c] sm:$0xf]
    %v474 = vld [vmem:[%s6 + $0x50] sm:$0xf]
    %v475 = vld [vmem:[%s6 + $0x54] sm:$0xf]
    %v476 = vld [vmem:[%s6 + $0x58] sm:$0xf]
    %v477 = vld [vmem:[%s6 + $0x5c] sm:$0xf]
    %v478 = vld [vmem:[%s6 + $0x60] sm:$0xf]
    %v479 = vld [vmem:[%s6 + $0x64] sm:$0xf]
    %v480 = vld [vmem:[%s6 + $0x68] sm:$0xf]
    %v481 = vld [vmem:[%s6 + $0x6c] sm:$0xf]
    %v482 = vld [vmem:[%s6 + $0x70] sm:$0xf]
    %v483 = vld [vmem:[%s6 + $0x74] sm:$0xf]
    %v484 = vld [vmem:[%s6 + $0x78] sm:$0xf]
    %v485 = vld [vmem:[%s6 + $0x7c] sm:$0xf]
    %v486 = vld [vmem:[%s6 + $0x80] sm:$0xf]
    %v487 = vld [vmem:[%s6 + $0x84] sm:$0xf]
    %v488 = vld [vmem:[%s6 + $0x88] sm:$0xf]
    %v489 = vld [vmem:[%s6 + $0x8c] sm:$0xf]
    %v490 = vld [vmem:[%s6 + $0x90] sm:$0xf]
    %v491 = vld [vmem:[%s6 + $0x94] sm:$0xf]
    %v492 = vld [vmem:[%s6 + $0x98] sm:$0xf]
    %v493 = vld [vmem:[%s6 + $0x9c] sm:$0xf]
    %v494 = vld [vmem:[%s6 + $0xa0] sm:$0xf]
    %v495 = vld [vmem:[%s6 + $0xa4] sm:$0xf]
    %v496 = vld [vmem:[%s6 + $0xa8] sm:$0xf]
    %v497 = vld [vmem:[%s6 + $0xac] sm:$0xf]
    %v498 = vld [vmem:[%s6 + $0xb0] sm:$0xf]
    %v499 = vld [vmem:[%s6 + $0xb4] sm:$0xf]
    %v500 = vld [vmem:[%s6 + $0xb8] sm:$0xf]
    %v501 = vld [vmem:[%s6 + $0xbc] sm:$0xf]
    %v502 = vld [vmem:[%s6 + $0xc0] sm:$0xf]
    %v503 = vld [vmem:[%s6 + $0xc4] sm:$0xf]
    %v504 = vld [vmem:[%s6 + $0xc8] sm:$0xf]
    %v505 = vld [vmem:[%s6 + $0xcc] sm:$0xf]
    %v506 = vld [vmem:[%s6 + $0xd0] sm:$0xf]
    %v507 = vld [vmem:[%s6 + $0xd4] sm:$0xf]
    %v508 = vld [vmem:[%s6 + $0xd8] sm:$0xf]
    %v509 = vld [vmem:[%s6 + $0xdc] sm:$0xf]
    %v510 = vld [vmem:[%s6 + $0xe0] sm:$0xf]
    %v511 = vld [vmem:[%s6 + $0xe4] sm:$0xf]
    %v512 = vld [vmem:[%s6 + $0xe8] sm:$0xf]
    %v513 = vld [vmem:[%s6 + $0xec] sm:$0xf]
    %v514 = vld [vmem:[%s6 + $0xf0] sm:$0xf]
    %v515 = vld [vmem:[%s6 + $0xf4] sm:$0xf]
    %v516 = vld [vmem:[%s6 + $0xf8] sm:$0xf]
    %v517 = vld [vmem:[%s6 + $0xfc] sm:$0xf]
    %v582 = vunpack.c.l.b16 %v454
    %v583 = vunpack.c.l.b16 %v455
    %v584 = vunpack.c.l.b16 %v456
    %v585 = vunpack.c.l.b16 %v457
    %v586 = vunpack.c.l.b16 %v458
    %v587 = vunpack.c.l.b16 %v459
    %v588 = vunpack.c.l.b16 %v460
    %v589 = vunpack.c.l.b16 %v461
    %v590 = vunpack.c.l.b16 %v462
    %v591 = vunpack.c.l.b16 %v463
    %v592 = vunpack.c.l.b16 %v464
    %v593 = vunpack.c.l.b16 %v465
    %v594 = vunpack.c.l.b16 %v466
    %v595 = vunpack.c.l.b16 %v467
    %v596 = vunpack.c.l.b16 %v468
    %v597 = vunpack.c.l.b16 %v469
    %v598 = vunpack.c.l.b16 %v470
    %v599 = vunpack.c.l.b16 %v471
    %v600 = vunpack.c.l.b16 %v472
    %v601 = vunpack.c.l.b16 %v473
    %v602 = vunpack.c.l.b16 %v474
    %v603 = vunpack.c.l.b16 %v475
    %v604 = vunpack.c.l.b16 %v476
    %v605 = vunpack.c.l.b16 %v477
    %v606 = vunpack.c.l.b16 %v478
    %v607 = vunpack.c.l.b16 %v479
    %v608 = vunpack.c.l.b16 %v480
    %v609 = vunpack.c.l.b16 %v481
    %v610 = vunpack.c.l.b16 %v482
    %v611 = vunpack.c.l.b16 %v483
    %v612 = vunpack.c.l.b16 %v484
    %v613 = vunpack.c.l.b16 %v485
    %v614 = vunpack.c.l.b16 %v486
    %v615 = vunpack.c.l.b16 %v487
    %v616 = vunpack.c.l.b16 %v488
    %v617 = vunpack.c.l.b16 %v489
    %v618 = vunpack.c.l.b16 %v490
    %v619 = vunpack.c.l.b16 %v491
    %v620 = vunpack.c.l.b16 %v492
    %v621 = vunpack.c.l.b16 %v493
    %v622 = vunpack.c.l.b16 %v494
    %v623 = vunpack.c.l.b16 %v495
    %v624 = vunpack.c.l.b16 %v496
    %v625 = vunpack.c.l.b16 %v497
    %v626 = vunpack.c.l.b16 %v498
    %v627 = vunpack.c.l.b16 %v499
    %v628 = vunpack.c.l.b16 %v500
    %v629 = vunpack.c.l.b16 %v501
    %v630 = vunpack.c.l.b16 %v502
    %v631 = vunpack.c.l.b16 %v503
    %v632 = vunpack.c.l.b16 %v504
    %v633 = vunpack.c.l.b16 %v505
    %v634 = vunpack.c.l.b16 %v506
    %v635 = vunpack.c.l.b16 %v507
    %v636 = vunpack.c.l.b16 %v508
    %v637 = vunpack.c.l.b16 %v509
    %v638 = vunpack.c.l.b16 %v510
    %v639 = vunpack.c.l.b16 %v511
    %v640 = vunpack.c.l.b16 %v512
    %v641 = vunpack.c.l.b16 %v513
    %v642 = vunpack.c.l.b16 %v514
    %v643 = vunpack.c.l.b16 %v515
    %v644 = vunpack.c.l.b16 %v516
    %v645 = vunpack.c.l.b16 %v517
    %v646 = vpack.c.b16 %v583, %v582
    %v647 = vpack.c.b16 %v585, %v584
    %v648 = vpack.c.b16 %v587, %v586
    %v649 = vpack.c.b16 %v589, %v588
    %v650 = vpack.c.b16 %v591, %v590
    %v651 = vpack.c.b16 %v593, %v592
    %v652 = vpack.c.b16 %v595, %v594
    %v653 = vpack.c.b16 %v597, %v596
    %v654 = vpack.c.b16 %v599, %v598
    %v655 = vpack.c.b16 %v601, %v600
    %v656 = vpack.c.b16 %v603, %v602
    %v657 = vpack.c.b16 %v605, %v604
    %v658 = vpack.c.b16 %v607, %v606
    %v659 = vpack.c.b16 %v609, %v608
    %v660 = vpack.c.b16 %v611, %v610
    %v661 = vpack.c.b16 %v613, %v612
    %v662 = vpack.c.b16 %v615, %v614
    %v663 = vpack.c.b16 %v617, %v616
    %v664 = vpack.c.b16 %v619, %v618
    %v665 = vpack.c.b16 %v621, %v620
    %v666 = vpack.c.b16 %v623, %v622
    %v667 = vpack.c.b16 %v625, %v624
    %v668 = vpack.c.b16 %v627, %v626
    %v669 = vpack.c.b16 %v629, %v628
    %v670 = vpack.c.b16 %v631, %v630
    %v671 = vpack.c.b16 %v633, %v632
    %v672 = vpack.c.b16 %v635, %v634
    %v673 = vpack.c.b16 %v637, %v636
    %v674 = vpack.c.b16 %v639, %v638
    %v675 = vpack.c.b16 %v641, %v640
    %v676 = vpack.c.b16 %v643, %v642
    %v677 = vpack.c.b16 %v645, %v644
    %710 = vmatprep.subr.bf16.mxu0 0
    %711 = vmatpush1.bf16.msra.mxu0 %v646
    %712 = vmatprep.subr.bf16.mxu0 0
    %713 = vmatpush1.bf16.msra.mxu0 %v647
    %714 = vmatprep.subr.bf16.mxu0 0
    %715 = vmatpush1.bf16.msra.mxu0 %v648
    %716 = vmatprep.subr.bf16.mxu0 0
    %717 = vmatpush1.bf16.msra.mxu0 %v649
    %718 = vmatprep.subr.bf16.mxu0 0
    %719 = vmatpush1.bf16.msra.mxu0 %v650
    %720 = vmatprep.subr.bf16.mxu0 0
    %721 = vmatpush1.bf16.msra.mxu0 %v651
    %722 = vmatprep.subr.bf16.mxu0 0
    %723 = vmatpush1.bf16.msra.mxu0 %v652
    %724 = vmatprep.subr.bf16.mxu0 0
    %725 = vmatpush1.bf16.msra.mxu0 %v653
    %726 = vmatprep.subr.bf16.mxu0 0
    %727 = vmatpush1.bf16.msra.mxu0 %v654
    %728 = vmatprep.subr.bf16.mxu0 0
    %729 = vmatpush1.bf16.msra.mxu0 %v655
    %730 = vmatprep.subr.bf16.mxu0 0
    %731 = vmatpush1.bf16.msra.mxu0 %v656
    %732 = vmatprep.subr.bf16.mxu0 0
    %733 = vmatpush1.bf16.msra.mxu0 %v657
    %734 = vmatprep.subr.bf16.mxu0 0
    %735 = vmatpush1.bf16.msra.mxu0 %v658
    %736 = vmatprep.subr.bf16.mxu0 0
    %737 = vmatpush1.bf16.msra.mxu0 %v659
    %738 = vmatprep.subr.bf16.mxu0 0
    %739 = vmatpush1.bf16.msra.mxu0 %v660
    %740 = vmatprep.subr.bf16.mxu0 0
    %741 = vmatpush1.bf16.msra.mxu0 %v661
    %742 = vmatprep.mubr.bf16.mxu0 %v451
    %743 = vmatmul.mubr.bf16.gmra.mrb[0].mxu0 %v450
    %v744 = vpop.f32.mrb[0].mxu0
    %v745 = vadd.f32 %v51, %v744
    %v746 = vpop.f32.mrb[0].mxu0
    %v747 = vpop.f32.mrb[0].mxu0
    %v748 = vpop.f32.mrb[0].mxu0
    %749 = vdwg.mxu0
    %750 = vmatprep.subr.bf16.mxu0 0
    %751 = vmatpush1.bf16.msra.mxu0 %v662
    %752 = vmatprep.subr.bf16.mxu0 0
    %753 = vmatpush1.bf16.msra.mxu0 %v663
    %754 = vmatprep.subr.bf16.mxu0 0
    %755 = vmatpush1.bf16.msra.mxu0 %v664
    %756 = vmatprep.subr.bf16.mxu0 0
    %757 = vmatpush1.bf16.msra.mxu0 %v665
    %758 = vmatprep.subr.bf16.mxu0 0
    %759 = vmatpush1.bf16.msra.mxu0 %v666
    %760 = vmatprep.subr.bf16.mxu0 0
    %761 = vmatpush1.bf16.msra.mxu0 %v667
    %762 = vmatprep.subr.bf16.mxu0 0
    %763 = vmatpush1.bf16.msra.mxu0 %v668
    %764 = vmatprep.subr.bf16.mxu0 0
    %765 = vmatpush1.bf16.msra.mxu0 %v669
    %766 = vmatprep.subr.bf16.mxu0 0
    %767 = vmatpush1.bf16.msra.mxu0 %v670
    %768 = vmatprep.subr.bf16.mxu0 0
    %769 = vmatpush1.bf16.msra.mxu0 %v671
    %770 = vmatprep.subr.bf16.mxu0 0
    %771 = vmatpush1.bf16.msra.mxu0 %v672
    %772 = vmatprep.subr.bf16.mxu0 0
    %773 = vmatpush1.bf16.msra.mxu0 %v673
    %774 = vmatprep.subr.bf16.mxu0 0
    %775 = vmatpush1.bf16.msra.mxu0 %v674
    %776 = vmatprep.subr.bf16.mxu0 0
    %777 = vmatpush1.bf16.msra.mxu0 %v675
    %778 = vmatprep.subr.bf16.mxu0 0
    %779 = vmatpush1.bf16.msra.mxu0 %v676
    %780 = vmatprep.subr.bf16.mxu0 0
    %781 = vmatpush1.bf16.msra.mxu0 %v677
    %782 = vmatprep.mubr.bf16.mxu0 %v453
    %783 = vmatmul.mubr.bf16.gmra.mrb[0].mxu0 %v452
    %v784 = vpop.f32.mrb[0].mxu0
    %v785 = vadd.f32 %v745, %v784
    %v786 = vpop.f32.mrb[0].mxu0
    %v787 = vpop.f32.mrb[0].mxu0
    %v788 = vpop.f32.mrb[0].mxu0
    %789 = vdwg.mxu0
    %v790 = vsub.f32 0.0, %v785
    %v791 = vmul.f32 %v790, 1.442695
    %v792 = vpow.pop %v791
    %v793 = vadd.f32 %v792, 1.0
    %v794 = vrcp.pop %v793
    %v795 = vmul.f32 %v794, 1.5
    %v796 = vadd.f32 %v795, -0.5
    %vm797 = vcmask 122880
    %798 = vst.msk [vmem:[#allocation2] sm:$0x1] %vm797, %v796
    %v799 = vld [vmem:[%s1] sm:$0xf]
    %v800 = vld [vmem:[%s1 + $0x4] sm:$0xf]
    %v801 = vld [vmem:[%s7] sm:$0xff]
    %v802 = vld [vmem:[%s7 + $0x8] sm:$0xff]
    %v803 = vld [vmem:[%s7 + $0x10] sm:$0xff]
    %v804 = vld [vmem:[%s7 + $0x18] sm:$0xff]
    %v805 = vpack.c.bf16 %v796, %v796
    %v806 = vld [vmem:[%s8] sm:$0xff]
    %v807 = vld [vmem:[%s8 + $0x8] sm:$0xff]
    %v808 = vld [vmem:[%s8 + $0x10] sm:$0xff]
    %v809 = vld [vmem:[%s8 + $0x18] sm:$0xff]
    %v814 = vunpack.c.l.b16 %v806
    %v815 = vunpack.c.h.b16 %v806
    %v816 = vunpack.c.l.b16 %v807
    %v817 = vunpack.c.h.b16 %v807
    %v818 = vunpack.c.l.b16 %v808
    %v819 = vunpack.c.h.b16 %v808
    %v820 = vunpack.c.l.b16 %v809
    %v821 = vunpack.c.h.b16 %v809
    %v822 = vpack.c.b16 %v818, %v814
    %v823 = vpack.c.b16 %v819, %v815
    %v824 = vpack.c.b16 %v820, %v816
    %v825 = vpack.c.b16 %v821, %v817
    %vm830 = vcmask 130048
    %v832 = vsel %vm830, %v805, 0
    %834 = vmatprep.subr.bf16.mxu0 %v823
    %835 = vmatpush1.bf16.msra.mxu0 %v822
    %836 = vmatprep.subr.bf16.mxu0 0
    %837 = vmatpush1.bf16.msra.mxu0 0
    %838 = vmatprep.subr.bf16.mxu0 0
    %839 = vmatpush1.bf16.msra.mxu0 0
    %840 = vmatprep.subr.bf16.mxu0 0
    %841 = vmatpush1.bf16.msra.mxu0 0
    %842 = vmatprep.subr.bf16.mxu0 0
    %843 = vmatpush1.bf16.msra.mxu0 0
    %844 = vmatprep.subr.bf16.mxu0 0
    %845 = vmatpush1.bf16.msra.mxu0 0
    %846 = vmatprep.subr.bf16.mxu0 0
    %847 = vmatpush1.bf16.msra.mxu0 0
    %848 = vmatprep.subr.bf16.mxu0 0
    %849 = vmatpush1.bf16.msra.mxu0 0
    %850 = vmatprep.subr.bf16.mxu0 0
    %851 = vmatpush1.bf16.msra.mxu0 0
    %852 = vmatprep.subr.bf16.mxu0 0
    %853 = vmatpush1.bf16.msra.mxu0 0
    %854 = vmatprep.subr.bf16.mxu0 0
    %855 = vmatpush1.bf16.msra.mxu0 0
    %856 = vmatprep.subr.bf16.mxu0 0
    %857 = vmatpush1.bf16.msra.mxu0 0
    %858 = vmatprep.subr.bf16.mxu0 0
    %859 = vmatpush1.bf16.msra.mxu0 0
    %860 = vmatprep.subr.bf16.mxu0 0
    %861 = vmatpush1.bf16.msra.mxu0 0
    %862 = vmatprep.subr.bf16.mxu0 0
    %863 = vmatpush1.bf16.msra.mxu0 0
    %864 = vmatprep.subr.bf16.mxu0 0
    %865 = vmatpush1.bf16.msra.mxu0 0
    %866 = vmatprep.mubr.bf16.mxu0 0
    %867 = vmatmul.mubr.bf16.gmra.mrb[0].mxu0 %v832
    %v868 = vpop.f32.mrb[0].mxu0
    %v869 = vadd.f32 0.0, %v868
    %v870 = vpop.f32.mrb[0].mxu0
    %v871 = vadd.f32 0.0, %v870
    %v872 = vpop.f32.mrb[0].mxu0
    %v873 = vpop.f32.mrb[0].mxu0
    %874 = vdwg.mxu0
    %875 = vmatprep.subr.bf16.mxu0 %v825
    %876 = vmatpush1.bf16.msra.mxu0 %v824
    %877 = vmatprep.subr.bf16.mxu0 0
    %878 = vmatpush1.bf16.msra.mxu0 0
    %879 = vmatprep.subr.bf16.mxu0 0
    %880 = vmatpush1.bf16.msra.mxu0 0
    %881 = vmatprep.subr.bf16.mxu0 0
    %882 = vmatpush1.bf16.msra.mxu0 0
    %883 = vmatprep.subr.bf16.mxu0 0
    %884 = vmatpush1.bf16.msra.mxu0 0
    %885 = vmatprep.subr.bf16.mxu0 0
    %886 = vmatpush1.bf16.msra.mxu0 0
    %887 = vmatprep.subr.bf16.mxu0 0
    %888 = vmatpush1.bf16.msra.mxu0 0
    %889 = vmatprep.subr.bf16.mxu0 0
    %890 = vmatpush1.bf16.msra.mxu0 0
    %891 = vmatprep.subr.bf16.mxu0 0
    %892 = vmatpush1.bf16.msra.mxu0 0
    %893 = vmatprep.subr.bf16.mxu0 0
    %894 = vmatpush1.bf16.msra.mxu0 0
    %895 = vmatprep.subr.bf16.mxu0 0
    %896 = vmatpush1.bf16.msra.mxu0 0
    %897 = vmatprep.subr.bf16.mxu0 0
    %898 = vmatpush1.bf16.msra.mxu0 0
    %899 = vmatprep.subr.bf16.mxu0 0
    %900 = vmatpush1.bf16.msra.mxu0 0
    %901 = vmatprep.subr.bf16.mxu0 0
    %902 = vmatpush1.bf16.msra.mxu0 0
    %903 = vmatprep.subr.bf16.mxu0 0
    %904 = vmatpush1.bf16.msra.mxu0 0
    %905 = vmatprep.subr.bf16.mxu0 0
    %906 = vmatpush1.bf16.msra.mxu0 0
    %907 = vmatprep.mubr.bf16.mxu0 0
    %908 = vmatmul.mubr.bf16.gmra.mrb[0].mxu0 %v832
    %v909 = vpop.f32.mrb[0].mxu0
    %v910 = vadd.f32 0.0, %v909
    %v911 = vpop.f32.mrb[0].mxu0
    %v912 = vadd.f32 0.0, %v911
    %v913 = vpop.f32.mrb[0].mxu0
    %v914 = vpop.f32.mrb[0].mxu0
    %915 = vdwg.mxu0
    %v916 = vlaneseq
    %v917 = vshrl.u32 %v916, 7
    %v918 = vsub.s32 0, %v917
    %v919 = vrot.slane %v869, %v918
    %v920 = vlaneseq
    %v921 = vshrl.u32 %v920, 7
    %v922 = vsub.s32 0, %v921
    %v923 = vrot.slane %v871, %v922
    %v924 = vlaneseq
    %v925 = vshrl.u32 %v924, 7
    %v926 = vsub.s32 0, %v925
    %v927 = vrot.slane %v910, %v926
    %v928 = vlaneseq
    %v929 = vshrl.u32 %v928, 7
    %v930 = vsub.s32 0, %v929
    %v931 = vrot.slane %v912, %v930
    %v934 = vunpack.c.l.b16 %v799
    %v935 = vunpack.c.l.b16 %v800
    %v936 = vpack.c.b16 %v935, %v934
    %v941 = vunpack.c.l.b16 %v801
    %v942 = vunpack.c.h.b16 %v801
    %v943 = vunpack.c.l.b16 %v802
    %v944 = vunpack.c.h.b16 %v802
    %v945 = vunpack.c.l.b16 %v803
    %v946 = vunpack.c.h.b16 %v803
    %v947 = vunpack.c.l.b16 %v804
    %v948 = vunpack.c.h.b16 %v804
    %v949 = vpack.c.b16 %v945, %v941
    %v950 = vpack.c.b16 %v946, %v942
    %v951 = vpack.c.b16 %v947, %v943
    %v952 = vpack.c.b16 %v948, %v944
    %v958 = vsel %vm830, %v936, 0
    %960 = vmatprep.subr.bf16.mxu0 %v950
    %961 = vmatpush1.bf16.msra.mxu0 %v949
    %962 = vmatprep.subr.bf16.mxu0 0
    %963 = vmatpush1.bf16.msra.mxu0 0
    %964 = vmatprep.subr.bf16.mxu0 0
    %965 = vmatpush1.bf16.msra.mxu0 0
    %966 = vmatprep.subr.bf16.mxu0 0
    %967 = vmatpush1.bf16.msra.mxu0 0
    %968 = vmatprep.subr.bf16.mxu0 0
    %969 = vmatpush1.bf16.msra.mxu0 0
    %970 = vmatprep.subr.bf16.mxu0 0
    %971 = vmatpush1.bf16.msra.mxu0 0
    %972 = vmatprep.subr.bf16.mxu0 0
    %973 = vmatpush1.bf16.msra.mxu0 0
    %974 = vmatprep.subr.bf16.mxu0 0
    %975 = vmatpush1.bf16.msra.mxu0 0
    %976 = vmatprep.subr.bf16.mxu0 0
    %977 = vmatpush1.bf16.msra.mxu0 0
    %978 = vmatprep.subr.bf16.mxu0 0
    %979 = vmatpush1.bf16.msra.mxu0 0
    %980 = vmatprep.subr.bf16.mxu0 0
    %981 = vmatpush1.bf16.msra.mxu0 0
    %982 = vmatprep.subr.bf16.mxu0 0
    %983 = vmatpush1.bf16.msra.mxu0 0
    %984 = vmatprep.subr.bf16.mxu0 0
    %985 = vmatpush1.bf16.msra.mxu0 0
    %986 = vmatprep.subr.bf16.mxu0 0
    %987 = vmatpush1.bf16.msra.mxu0 0
    %988 = vmatprep.subr.bf16.mxu0 0
    %989 = vmatpush1.bf16.msra.mxu0 0
    %990 = vmatprep.subr.bf16.mxu0 0
    %991 = vmatpush1.bf16.msra.mxu0 0
    %992 = vmatprep.mubr.bf16.mxu0 0
    %993 = vmatmul.mubr.bf16.gmra.mrb[0].mxu0 %v958
    %v994 = vpop.f32.mrb[0].mxu0
    %v995 = vadd.f32 %v919, %v994
    %v996 = vpop.f32.mrb[0].mxu0
    %v997 = vadd.f32 %v923, %v996
    %v998 = vpop.f32.mrb[0].mxu0
    %v999 = vadd.f32 %v919, %v998
    %v1000 = vpop.f32.mrb[0].mxu0
    %v1001 = vadd.f32 %v923, %v1000
    %1002 = vdwg.mxu0
    %1003 = vmatprep.subr.bf16.mxu0 %v952
    %1004 = vmatpush1.bf16.msra.mxu0 %v951
    %1005 = vmatprep.subr.bf16.mxu0 0
    %1006 = vmatpush1.bf16.msra.mxu0 0
    %1007 = vmatprep.subr.bf16.mxu0 0
    %1008 = vmatpush1.bf16.msra.mxu0 0
    %1009 = vmatprep.subr.bf16.mxu0 0
    %1010 = vmatpush1.bf16.msra.mxu0 0
    %1011 = vmatprep.subr.bf16.mxu0 0
    %1012 = vmatpush1.bf16.msra.mxu0 0
    %1013 = vmatprep.subr.bf16.mxu0 0
    %1014 = vmatpush1.bf16.msra.mxu0 0
    %1015 = vmatprep.subr.bf16.mxu0 0
    %1016 = vmatpush1.bf16.msra.mxu0 0
    %1017 = vmatprep.subr.bf16.mxu0 0
    %1018 = vmatpush1.bf16.msra.mxu0 0
    %1019 = vmatprep.subr.bf16.mxu0 0
    %1020 = vmatpush1.bf16.msra.mxu0 0
    %1021 = vmatprep.subr.bf16.mxu0 0
    %1022 = vmatpush1.bf16.msra.mxu0 0
    %1023 = vmatprep.subr.bf16.mxu0 0
    %1024 = vmatpush1.bf16.msra.mxu0 0
    %1025 = vmatprep.subr.bf16.mxu0 0
    %1026 = vmatpush1.bf16.msra.mxu0 0
    %1027 = vmatprep.subr.bf16.mxu0 0
    %1028 = vmatpush1.bf16.msra.mxu0 0
    %1029 = vmatprep.subr.bf16.mxu0 0
    %1030 = vmatpush1.bf16.msra.mxu0 0
    %1031 = vmatprep.subr.bf16.mxu0 0
    %1032 = vmatpush1.bf16.msra.mxu0 0
    %1033 = vmatprep.subr.bf16.mxu0 0
    %1034 = vmatpush1.bf16.msra.mxu0 0
    %1035 = vmatprep.mubr.bf16.mxu0 0
    %1036 = vmatmul.mubr.bf16.gmra.mrb[0].mxu0 %v958
    %v1037 = vpop.f32.mrb[0].mxu0
    %v1038 = vadd.f32 %v927, %v1037
    %v1039 = vpop.f32.mrb[0].mxu0
    %v1040 = vadd.f32 %v931, %v1039
    %v1041 = vpop.f32.mrb[0].mxu0
    %v1042 = vadd.f32 %v927, %v1041
    %v1043 = vpop.f32.mrb[0].mxu0
    %v1044 = vadd.f32 %v931, %v1043
    %1045 = vdwg.mxu0
    %v1046 = vld [vmem:[%s2] sm:$0xff]
    %v1047 = vld [vmem:[%s2 + $0x8] sm:$0xff]
    %v1048 = vld [vmem:[%s9] sm:$0xf]
    %1050 = vset.pattern.permute.xlu0 0
    %1051 = vperm.xlu0 %1050, %v1046
    %v1052 = vpop.permute.xlu0 %1051
    %1055 = vset.pattern.permute.xlu0 0
    %1056 = vperm.xlu0 %1055, %v1047
    %v1057 = vpop.permute.xlu0 %1056
    %v1060 = vlaneseq
    %v1061 = vshrl.u32 %v1060, 7
    %v1062 = vsub.s32 0, %v1061
    %v1063 = vrot.slane %v1048, %v1062
    %v1064 = vlaneseq
    %v1065 = vshrl.u32 %v1064, 7
    %v1066 = vsub.s32 1, %v1065
    %v1067 = vrot.slane %v1048, %v1066
    %v1068 = vlaneseq
    %v1069 = vshrl.u32 %v1068, 7
    %v1070 = vsub.s32 2, %v1069
    %v1071 = vrot.slane %v1048, %v1070
    %v1072 = vlaneseq
    %v1073 = vshrl.u32 %v1072, 7
    %v1074 = vsub.s32 3, %v1073
    %v1075 = vrot.slane %v1048, %v1074
    %v1080 = vmul.f32 %v1052, %v1063
    %v1081 = vmul.f32 %v1052, %v1067
    %v1082 = vmul.f32 %v1052, %v1071
    %v1083 = vmul.f32 %v1052, %v1075
    %v1084 = vmul.f32 %v1057, %v1063
    %v1085 = vmul.f32 %v1057, %v1067
    %v1086 = vmul.f32 %v1057, %v1071
    %v1087 = vmul.f32 %v1057, %v1075
    %v1088 = vadd.f32 %v995, %v1080
    %v1089 = vadd.f32 %v997, %v1081
    %v1090 = vadd.f32 %v1038, %v1082
    %v1091 = vadd.f32 %v1040, %v1083
    %v1092 = vadd.f32 %v999, %v1084
    %v1093 = vadd.f32 %v1001, %v1085
    %v1094 = vadd.f32 %v1042, %v1086
    %v1095 = vadd.f32 %v1044, %v1087
    %v1096 = vld [vmem:[%s3] sm:$0xf]
    %v1098 = vlaneseq
    %v1099 = vshrl.u32 %v1098, 7
    %v1100 = vsub.s32 0, %v1099
    %v1101 = vrot.slane %v1096, %v1100
    %v1102 = vlaneseq
    %v1103 = vshrl.u32 %v1102, 7
    %v1104 = vsub.s32 1, %v1103
    %v1105 = vrot.slane %v1096, %v1104
    %v1106 = vlaneseq
    %v1107 = vshrl.u32 %v1106, 7
    %v1108 = vsub.s32 2, %v1107
    %v1109 = vrot.slane %v1096, %v1108
    %v1110 = vlaneseq
    %v1111 = vshrl.u32 %v1110, 7
    %v1112 = vsub.s32 3, %v1111
    %v1113 = vrot.slane %v1096, %v1112
    %v1118 = vadd.f32 %v1088, %v1101
    %v1119 = vadd.f32 %v1089, %v1105
    %v1120 = vadd.f32 %v1090, %v1109
    %v1121 = vadd.f32 %v1091, %v1113
    %v1122 = vadd.f32 %v1092, %v1101
    %v1123 = vadd.f32 %v1093, %v1105
    %v1124 = vadd.f32 %v1094, %v1109
    %v1125 = vadd.f32 %v1095, %v1113
    %vm1126 = vcmp.gt.f32.partialorder %v1118, 0.0
    %vm1127 = vcmp.gt.f32.partialorder %v1119, 0.0
    %vm1128 = vcmp.gt.f32.partialorder %v1120, 0.0
    %vm1129 = vcmp.gt.f32.partialorder %v1121, 0.0
    %vm1130 = vcmp.gt.f32.partialorder %v1122, 0.0
    %vm1131 = vcmp.gt.f32.partialorder %v1123, 0.0
    %vm1132 = vcmp.gt.f32.partialorder %v1124, 0.0
    %vm1133 = vcmp.gt.f32.partialorder %v1125, 0.0
    %v1134 = vmul.f32 %v1118, 0.01
    %v1135 = vmul.f32 %v1119, 0.01
    %v1136 = vmul.f32 %v1120, 0.01
    %v1137 = vmul.f32 %v1121, 0.01
    %v1138 = vmul.f32 %v1122, 0.01
    %v1139 = vmul.f32 %v1123, 0.01
    %v1140 = vmul.f32 %v1124, 0.01
    %v1141 = vmul.f32 %v1125, 0.01
    %v1142 = vsel %vm1126, %v1118, %v1134
    %v1143 = vsel %vm1127, %v1119, %v1135
    %v1144 = vsel %vm1128, %v1120, %v1136
    %v1145 = vsel %vm1129, %v1121, %v1137
    %v1146 = vsel %vm1130, %v1122, %v1138
    %v1147 = vsel %vm1131, %v1123, %v1139
    %v1148 = vsel %vm1132, %v1124, %v1140
    %v1149 = vsel %vm1133, %v1125, %v1141
    %v1150 = vpack.c.bf16 %v1146, %v1142
    %v1151 = vpack.c.bf16 %v1147, %v1143
    %v1152 = vpack.c.bf16 %v1148, %v1144
    %v1153 = vpack.c.bf16 %v1149, %v1145
    %v1154 = vld [vmem:[%s10] sm:$0xf]
    %v1155 = vld [vmem:[%s10 + $0x4] sm:$0xf]
    %v1156 = vld [vmem:[%s10 + $0x8] sm:$0xf]
    %v1157 = vld [vmem:[%s10 + $0xc] sm:$0xf]
    %v1158 = vld [vmem:[%s10 + $0x10] sm:$0xf]
    %v1159 = vld [vmem:[%s10 + $0x14] sm:$0xf]
    %v1160 = vld [vmem:[%s10 + $0x18] sm:$0xf]
    %v1161 = vld [vmem:[%s10 + $0x1c] sm:$0xf]
    %v1162 = vld [vmem:[%s10 + $0x20] sm:$0xf]
    %v1163 = vld [vmem:[%s10 + $0x24] sm:$0xf]
    %v1164 = vld [vmem:[%s10 + $0x28] sm:$0xf]
    %v1165 = vld [vmem:[%s10 + $0x2c] sm:$0xf]
    %v1166 = vld [vmem:[%s10 + $0x30] sm:$0xf]
    %v1167 = vld [vmem:[%s10 + $0x34] sm:$0xf]
    %v1168 = vld [vmem:[%s10 + $0x38] sm:$0xf]
    %v1169 = vld [vmem:[%s10 + $0x3c] sm:$0xf]
    %v1170 = vld [vmem:[%s10 + $0x40] sm:$0xf]
    %v1171 = vld [vmem:[%s10 + $0x44] sm:$0xf]
    %v1172 = vld [vmem:[%s10 + $0x48] sm:$0xf]
    %v1173 = vld [vmem:[%s10 + $0x4c] sm:$0xf]
    %v1174 = vld [vmem:[%s10 + $0x50] sm:$0xf]
    %v1175 = vld [vmem:[%s10 + $0x54] sm:$0xf]
    %v1176 = vld [vmem:[%s10 + $0x58] sm:$0xf]
    %v1177 = vld [vmem:[%s10 + $0x5c] sm:$0xf]
    %v1178 = vld [vmem:[%s10 + $0x60] sm:$0xf]
    %v1179 = vld [vmem:[%s10 + $0x64] sm:$0xf]
    %v1180 = vld [vmem:[%s10 + $0x68] sm:$0xf]
    %v1181 = vld [vmem:[%s10 + $0x6c] sm:$0xf]
    %v1182 = vld [vmem:[%s10 + $0x70] sm:$0xf]
    %v1183 = vld [vmem:[%s10 + $0x74] sm:$0xf]
    %v1184 = vld [vmem:[%s10 + $0x78] sm:$0xf]
    %v1185 = vld [vmem:[%s10 + $0x7c] sm:$0xf]
    %v1186 = vld [vmem:[%s10 + $0x80] sm:$0xf]
    %v1187 = vld [vmem:[%s10 + $0x84] sm:$0xf]
    %v1188 = vld [vmem:[%s10 + $0x88] sm:$0xf]
    %v1189 = vld [vmem:[%s10 + $0x8c] sm:$0xf]
    %v1190 = vld [vmem:[%s10 + $0x90] sm:$0xf]
    %v1191 = vld [vmem:[%s10 + $0x94] sm:$0xf]
    %v1192 = vld [vmem:[%s10 + $0x98] sm:$0xf]
    %v1193 = vld [vmem:[%s10 + $0x9c] sm:$0xf]
    %v1194 = vld [vmem:[%s10 + $0xa0] sm:$0xf]
    %v1195 = vld [vmem:[%s10 + $0xa4] sm:$0xf]
    %v1196 = vld [vmem:[%s10 + $0xa8] sm:$0xf]
    %v1197 = vld [vmem:[%s10 + $0xac] sm:$0xf]
    %v1198 = vld [vmem:[%s10 + $0xb0] sm:$0xf]
    %v1199 = vld [vmem:[%s10 + $0xb4] sm:$0xf]
    %v1200 = vld [vmem:[%s10 + $0xb8] sm:$0xf]
    %v1201 = vld [vmem:[%s10 + $0xbc] sm:$0xf]
    %v1202 = vld [vmem:[%s10 + $0xc0] sm:$0xf]
    %v1203 = vld [vmem:[%s10 + $0xc4] sm:$0xf]
    %v1204 = vld [vmem:[%s10 + $0xc8] sm:$0xf]
    %v1205 = vld [vmem:[%s10 + $0xcc] sm:$0xf]
    %v1206 = vld [vmem:[%s10 + $0xd0] sm:$0xf]
    %v1207 = vld [vmem:[%s10 + $0xd4] sm:$0xf]
    %v1208 = vld [vmem:[%s10 + $0xd8] sm:$0xf]
    %v1209 = vld [vmem:[%s10 + $0xdc] sm:$0xf]
    %v1210 = vld [vmem:[%s10 + $0xe0] sm:$0xf]
    %v1211 = vld [vmem:[%s10 + $0xe4] sm:$0xf]
    %v1212 = vld [vmem:[%s10 + $0xe8] sm:$0xf]
    %v1213 = vld [vmem:[%s10 + $0xec] sm:$0xf]
    %v1214 = vld [vmem:[%s10 + $0xf0] sm:$0xf]
    %v1215 = vld [vmem:[%s10 + $0xf4] sm:$0xf]
    %v1216 = vld [vmem:[%s10 + $0xf8] sm:$0xf]
    %v1217 = vld [vmem:[%s10 + $0xfc] sm:$0xf]
    %v1282 = vunpack.c.l.b16 %v1154
    %v1283 = vunpack.c.l.b16 %v1155
    %v1284 = vunpack.c.l.b16 %v1156
    %v1285 = vunpack.c.l.b16 %v1157
    %v1286 = vunpack.c.l.b16 %v1158
    %v1287 = vunpack.c.l.b16 %v1159
    %v1288 = vunpack.c.l.b16 %v1160
    %v1289 = vunpack.c.l.b16 %v1161
    %v1290 = vunpack.c.l.b16 %v1162
    %v1291 = vunpack.c.l.b16 %v1163
    %v1292 = vunpack.c.l.b16 %v1164
    %v1293 = vunpack.c.l.b16 %v1165
    %v1294 = vunpack.c.l.b16 %v1166
    %v1295 = vunpack.c.l.b16 %v1167
    %v1296 = vunpack.c.l.b16 %v1168
    %v1297 = vunpack.c.l.b16 %v1169
    %v1298 = vunpack.c.l.b16 %v1170
    %v1299 = vunpack.c.l.b16 %v1171
    %v1300 = vunpack.c.l.b16 %v1172
    %v1301 = vunpack.c.l.b16 %v1173
    %v1302 = vunpack.c.l.b16 %v1174
    %v1303 = vunpack.c.l.b16 %v1175
    %v1304 = vunpack.c.l.b16 %v1176
    %v1305 = vunpack.c.l.b16 %v1177
    %v1306 = vunpack.c.l.b16 %v1178
    %v1307 = vunpack.c.l.b16 %v1179
    %v1308 = vunpack.c.l.b16 %v1180
    %v1309 = vunpack.c.l.b16 %v1181
    %v1310 = vunpack.c.l.b16 %v1182
    %v1311 = vunpack.c.l.b16 %v1183
    %v1312 = vunpack.c.l.b16 %v1184
    %v1313 = vunpack.c.l.b16 %v1185
    %v1314 = vunpack.c.l.b16 %v1186
    %v1315 = vunpack.c.l.b16 %v1187
    %v1316 = vunpack.c.l.b16 %v1188
    %v1317 = vunpack.c.l.b16 %v1189
    %v1318 = vunpack.c.l.b16 %v1190
    %v1319 = vunpack.c.l.b16 %v1191
    %v1320 = vunpack.c.l.b16 %v1192
    %v1321 = vunpack.c.l.b16 %v1193
    %v1322 = vunpack.c.l.b16 %v1194
    %v1323 = vunpack.c.l.b16 %v1195
    %v1324 = vunpack.c.l.b16 %v1196
    %v1325 = vunpack.c.l.b16 %v1197
    %v1326 = vunpack.c.l.b16 %v1198
    %v1327 = vunpack.c.l.b16 %v1199
    %v1328 = vunpack.c.l.b16 %v1200
    %v1329 = vunpack.c.l.b16 %v1201
    %v1330 = vunpack.c.l.b16 %v1202
    %v1331 = vunpack.c.l.b16 %v1203
    %v1332 = vunpack.c.l.b16 %v1204
    %v1333 = vunpack.c.l.b16 %v1205
    %v1334 = vunpack.c.l.b16 %v1206
    %v1335 = vunpack.c.l.b16 %v1207
    %v1336 = vunpack.c.l.b16 %v1208
    %v1337 = vunpack.c.l.b16 %v1209
    %v1338 = vunpack.c.l.b16 %v1210
    %v1339 = vunpack.c.l.b16 %v1211
    %v1340 = vunpack.c.l.b16 %v1212
    %v1341 = vunpack.c.l.b16 %v1213
    %v1342 = vunpack.c.l.b16 %v1214
    %v1343 = vunpack.c.l.b16 %v1215
    %v1344 = vunpack.c.l.b16 %v1216
    %v1345 = vunpack.c.l.b16 %v1217
    %v1346 = vpack.c.b16 %v1283, %v1282
    %v1347 = vpack.c.b16 %v1285, %v1284
    %v1348 = vpack.c.b16 %v1287, %v1286
    %v1349 = vpack.c.b16 %v1289, %v1288
    %v1350 = vpack.c.b16 %v1291, %v1290
    %v1351 = vpack.c.b16 %v1293, %v1292
    %v1352 = vpack.c.b16 %v1295, %v1294
    %v1353 = vpack.c.b16 %v1297, %v1296
    %v1354 = vpack.c.b16 %v1299, %v1298
    %v1355 = vpack.c.b16 %v1301, %v1300
    %v1356 = vpack.c.b16 %v1303, %v1302
    %v1357 = vpack.c.b16 %v1305, %v1304
    %v1358 = vpack.c.b16 %v1307, %v1306
    %v1359 = vpack.c.b16 %v1309, %v1308
    %v1360 = vpack.c.b16 %v1311, %v1310
    %v1361 = vpack.c.b16 %v1313, %v1312
    %v1362 = vpack.c.b16 %v1315, %v1314
    %v1363 = vpack.c.b16 %v1317, %v1316
    %v1364 = vpack.c.b16 %v1319, %v1318
    %v1365 = vpack.c.b16 %v1321, %v1320
    %v1366 = vpack.c.b16 %v1323, %v1322
    %v1367 = vpack.c.b16 %v1325, %v1324
    %v1368 = vpack.c.b16 %v1327, %v1326
    %v1369 = vpack.c.b16 %v1329, %v1328
    %v1370 = vpack.c.b16 %v1331, %v1330
    %v1371 = vpack.c.b16 %v1333, %v1332
    %v1372 = vpack.c.b16 %v1335, %v1334
    %v1373 = vpack.c.b16 %v1337, %v1336
    %v1374 = vpack.c.b16 %v1339, %v1338
    %v1375 = vpack.c.b16 %v1341, %v1340
    %v1376 = vpack.c.b16 %v1343, %v1342
    %v1377 = vpack.c.b16 %v1345, %v1344
    %1410 = vmatprep.subr.bf16.mxu0 0
    %1411 = vmatpush1.bf16.msra.mxu0 %v1346
    %1412 = vmatprep.subr.bf16.mxu0 0
    %1413 = vmatpush1.bf16.msra.mxu0 %v1347
    %1414 = vmatprep.subr.bf16.mxu0 0
    %1415 = vmatpush1.bf16.msra.mxu0 %v1348
    %1416 = vmatprep.subr.bf16.mxu0 0
    %1417 = vmatpush1.bf16.msra.mxu0 %v1349
    %1418 = vmatprep.subr.bf16.mxu0 0
    %1419 = vmatpush1.bf16.msra.mxu0 %v1350
    %1420 = vmatprep.subr.bf16.mxu0 0
    %1421 = vmatpush1.bf16.msra.mxu0 %v1351
    %1422 = vmatprep.subr.bf16.mxu0 0
    %1423 = vmatpush1.bf16.msra.mxu0 %v1352
    %1424 = vmatprep.subr.bf16.mxu0 0
    %1425 = vmatpush1.bf16.msra.mxu0 %v1353
    %1426 = vmatprep.subr.bf16.mxu0 0
    %1427 = vmatpush1.bf16.msra.mxu0 %v1354
    %1428 = vmatprep.subr.bf16.mxu0 0
    %1429 = vmatpush1.bf16.msra.mxu0 %v1355
    %1430 = vmatprep.subr.bf16.mxu0 0
    %1431 = vmatpush1.bf16.msra.mxu0 %v1356
    %1432 = vmatprep.subr.bf16.mxu0 0
    %1433 = vmatpush1.bf16.msra.mxu0 %v1357
    %1434 = vmatprep.subr.bf16.mxu0 0
    %1435 = vmatpush1.bf16.msra.mxu0 %v1358
    %1436 = vmatprep.subr.bf16.mxu0 0
    %1437 = vmatpush1.bf16.msra.mxu0 %v1359
    %1438 = vmatprep.subr.bf16.mxu0 0
    %1439 = vmatpush1.bf16.msra.mxu0 %v1360
    %1440 = vmatprep.subr.bf16.mxu0 0
    %1441 = vmatpush1.bf16.msra.mxu0 %v1361
    %1442 = vmatprep.mubr.bf16.mxu0 %v1151
    %1443 = vmatmul.mubr.bf16.gmra.mrb[0].mxu0 %v1150
    %v1444 = vpop.f32.mrb[0].mxu0
    %v1445 = vadd.f32 %v52, %v1444
    %v1446 = vpop.f32.mrb[0].mxu0
    %v1447 = vpop.f32.mrb[0].mxu0
    %v1448 = vadd.f32 %v52, %v1447
    %v1449 = vpop.f32.mrb[0].mxu0
    %1450 = vdwg.mxu0
    %1451 = vmatprep.subr.bf16.mxu0 0
    %1452 = vmatpush1.bf16.msra.mxu0 %v1362
    %1453 = vmatprep.subr.bf16.mxu0 0
    %1454 = vmatpush1.bf16.msra.mxu0 %v1363
    %1455 = vmatprep.subr.bf16.mxu0 0
    %1456 = vmatpush1.bf16.msra.mxu0 %v1364
    %1457 = vmatprep.subr.bf16.mxu0 0
    %1458 = vmatpush1.bf16.msra.mxu0 %v1365
    %1459 = vmatprep.subr.bf16.mxu0 0
    %1460 = vmatpush1.bf16.msra.mxu0 %v1366
    %1461 = vmatprep.subr.bf16.mxu0 0
    %1462 = vmatpush1.bf16.msra.mxu0 %v1367
    %1463 = vmatprep.subr.bf16.mxu0 0
    %1464 = vmatpush1.bf16.msra.mxu0 %v1368
    %1465 = vmatprep.subr.bf16.mxu0 0
    %1466 = vmatpush1.bf16.msra.mxu0 %v1369
    %1467 = vmatprep.subr.bf16.mxu0 0
    %1468 = vmatpush1.bf16.msra.mxu0 %v1370
    %1469 = vmatprep.subr.bf16.mxu0 0
    %1470 = vmatpush1.bf16.msra.mxu0 %v1371
    %1471 = vmatprep.subr.bf16.mxu0 0
    %1472 = vmatpush1.bf16.msra.mxu0 %v1372
    %1473 = vmatprep.subr.bf16.mxu0 0
    %1474 = vmatpush1.bf16.msra.mxu0 %v1373
    %1475 = vmatprep.subr.bf16.mxu0 0
    %1476 = vmatpush1.bf16.msra.mxu0 %v1374
    %1477 = vmatprep.subr.bf16.mxu0 0
    %1478 = vmatpush1.bf16.msra.mxu0 %v1375
    %1479 = vmatprep.subr.bf16.mxu0 0
    %1480 = vmatpush1.bf16.msra.mxu0 %v1376
    %1481 = vmatprep.subr.bf16.mxu0 0
    %1482 = vmatpush1.bf16.msra.mxu0 %v1377
    %1483 = vmatprep.mubr.bf16.mxu0 %v1153
    %1484 = vmatmul.mubr.bf16.gmra.mrb[0].mxu0 %v1152
    %v1485 = vpop.f32.mrb[0].mxu0
    %v1486 = vadd.f32 %v1445, %v1485
    %v1487 = vpop.f32.mrb[0].mxu0
    %v1488 = vpop.f32.mrb[0].mxu0
    %v1489 = vadd.f32 %v1448, %v1488
    %v1490 = vpop.f32.mrb[0].mxu0
    %1491 = vdwg.mxu0
    %vm1492 = vcmp.gt.f32.partialorder %v1486, 0.0
    %vm1493 = vcmp.gt.f32.partialorder %v1489, 0.0
    %v1494 = vmul.f32 %v1486, 0.01
    %v1495 = vmul.f32 %v1489, 0.01
    %v1496 = vsel %vm1492, %v1486, %v1494
    %v1497 = vsel %vm1493, %v1489, %v1495
    %v1498 = vpack.c.bf16 %v1497, %v1496
    %v1499 = vld [vmem:[%s11] sm:$0xf]
    %v1500 = vld [vmem:[%s11 + $0x4] sm:$0xf]
    %v1501 = vld [vmem:[%s11 + $0x8] sm:$0xf]
    %v1502 = vld [vmem:[%s11 + $0xc] sm:$0xf]
    %v1507 = vunpack.c.l.b16 %v1499
    %v1508 = vunpack.c.l.b16 %v1500
    %v1509 = vunpack.c.l.b16 %v1501
    %v1510 = vunpack.c.l.b16 %v1502
    %v1511 = vpack.c.b16 %v1508, %v1507
    %v1512 = vpack.c.b16 %v1510, %v1509
    %vm1515 = vcmask 261120
    %v1517 = vsel %vm1515, %v1498, 0
    %1519 = vmatprep.subr.bf16.mxu0 0
    %1520 = vmatpush1.bf16.msra.mxu0 %v1511
    %1521 = vmatprep.subr.bf16.mxu0 0
    %1522 = vmatpush1.bf16.msra.mxu0 %v1512
    %1523 = vmatprep.subr.bf16.mxu0 0
    %1524 = vmatpush1.bf16.msra.mxu0 0
    %1525 = vmatprep.subr.bf16.mxu0 0
    %1526 = vmatpush1.bf16.msra.mxu0 0
    %1527 = vmatprep.subr.bf16.mxu0 0
    %1528 = vmatpush1.bf16.msra.mxu0 0
    %1529 = vmatprep.subr.bf16.mxu0 0
    %1530 = vmatpush1.bf16.msra.mxu0 0
    %1531 = vmatprep.subr.bf16.mxu0 0
    %1532 = vmatpush1.bf16.msra.mxu0 0
    %1533 = vmatprep.subr.bf16.mxu0 0
    %1534 = vmatpush1.bf16.msra.mxu0 0
    %1535 = vmatprep.subr.bf16.mxu0 0
    %1536 = vmatpush1.bf16.msra.mxu0 0
    %1537 = vmatprep.subr.bf16.mxu0 0
    %1538 = vmatpush1.bf16.msra.mxu0 0
    %1539 = vmatprep.subr.bf16.mxu0 0
    %1540 = vmatpush1.bf16.msra.mxu0 0
    %1541 = vmatprep.subr.bf16.mxu0 0
    %1542 = vmatpush1.bf16.msra.mxu0 0
    %1543 = vmatprep.subr.bf16.mxu0 0
    %1544 = vmatpush1.bf16.msra.mxu0 0
    %1545 = vmatprep.subr.bf16.mxu0 0
    %1546 = vmatpush1.bf16.msra.mxu0 0
    %1547 = vmatprep.subr.bf16.mxu0 0
    %1548 = vmatpush1.bf16.msra.mxu0 0
    %1549 = vmatprep.subr.bf16.mxu0 0
    %1550 = vmatpush1.bf16.msra.mxu0 0
    %1551 = vmatprep.mubr.bf16.mxu0 0
    %1552 = vmatmul.mubr.bf16.gmra.mrb[0].mxu0 %v1517
    %v1553 = vpop.f32.mrb[0].mxu0
    %v1554 = vadd.f32 %v53, %v1553
    %v1555 = vpop.f32.mrb[0].mxu0
    %v1556 = vpop.f32.mrb[0].mxu0
    %v1557 = vadd.f32 %v53, %v1556
    %v1558 = vpop.f32.mrb[0].mxu0
    %1559 = vdwg.mxu0
    %vm1560 = vcmask 7168
    %1561 = vst.msk [vmem:[%s14] sm:$0xff] %vm1560, %v1554
    %1562 = vst.msk [vmem:[%s14 + $0x8] sm:$0xff] %vm1560, %v1557
    // Predicated region
    $region54: #{tpu_custom_call.1} parent=1 // pred_check
      _
    $region55: #{tpu_custom_call.1} parent=1 // pred_check_branch
      %1564 = sbr.rel (0) target = $region57
    $region56: #{tpu_custom_call.1} parent=1 // pred_region
      %s1566 = ssub.s32 16, 16
      %1567 = vsyncadd [#allocation3], %s1566
      %s1569 = sshll.u32 [#allocation2], 4
      %s1570 = int_to_ptr.vmem [resolvable:$true] %s1569
      %1572 = dma.vmem_to_hbm [thread:$0]  %s1570, 16, %s13, [#allocation3]
    $region57: #{tpu_custom_call.1} parent=1 // pred_fallthru
      _
    // Predicated region
    $region58: #{tpu_custom_call.1} parent=1 // pred_check
      _
    $region59: #{tpu_custom_call.1} parent=1 // pred_check_branch
      %1574 = sbr.rel (0) target = $region61
    $region60: #{tpu_custom_call.1} parent=1 // pred_region
      _
    $region61: #{tpu_custom_call.1} parent=1 // pred_fallthru
      _
    // Predicated region
    $region62: #{tpu_custom_call.1} parent=1 // pred_check
      _
    $region63: #{tpu_custom_call.1} parent=1 // pred_check_branch
      %1576 = sbr.rel (0) target = $region65
    $region64: #{tpu_custom_call.1} parent=1 // pred_region
      %1577 = dma.done [#allocation3], 16
    $region65: #{tpu_custom_call.1} parent=1 // pred_fallthru
      _
    // Predicated region
    $region66: #{tpu_custom_call.1} parent=1 // pred_check
      _
    $region67: #{tpu_custom_call.1} parent=1 // pred_check_branch
      %1579 = sbr.rel (0) target = $region69
    $region68: #{tpu_custom_call.1} parent=1 // pred_region
      _
    $region69: #{tpu_custom_call.1} parent=1 // pred_fallthru
      _
    %1580 = vsyncpa [#allocation3], 1

</llo_original>
